<compile_context>
chip_gen: v6e
topology: v6e:2x2x1
jax: 0.10.0
libtpu: 0.0.40
codegen_flags: <defaults>
</compile_context>

<pallas_src>
import functools

import numpy as np

import jax
import jax.numpy as jnp
from jax.experimental import pallas as pl
from jax.experimental.pallas import tpu as pltpu


# ----------------------------------------------------------------------------
# Pallas kernel: direct fold -> multiply-by-1/count -> unfold
# ----------------------------------------------------------------------------
def _make_agg0_kernel(patch_w, pixels_h, pixels_w):
    p, H, W = patch_w, pixels_h, pixels_w
    H_out, W_out = H - p + 1, W - p + 1

    def kernel(x_ref, invc_ref, o_ref, img_ref):
        # x_ref   : (p*p, H_out, W_out, TM)   patch planes, batch on lanes
        # invc_ref: (H, W, 1)                 precomputed 1 / overlap-count
        # o_ref   : (p*p, H_out, W_out, TM)   unfolded averaged patches
        # img_ref : (H, W, TM) VMEM scratch   folded image accumulator

        # zero the accumulator image for this M-tile
        img_ref[...] = jnp.zeros_like(img_ref)

        # fold: scatter-add each (kh, kw) patch plane at its spatial offset
        for kh in range(p):
            for kw in range(p):
                img_ref[kh:kh + H_out, kw:kw + W_out, :] += x_ref[kh * p + kw]

        # overlap-average: multiply by reciprocal coverage count
        # (broadcast (H, W, 1) across the lane/batch dim)
        img_ref[...] = img_ref[...] * invc_ref[...]

        # unfold: gather the shifted windows of the averaged image back out
        for kh in range(p):
            for kw in range(p):
                o_ref[kh * p + kw] = img_ref[kh:kh + H_out, kw:kw + W_out, :]

    return kernel


@functools.lru_cache(maxsize=None)
def _inv_coverage_count(patch_w, pixels_h, pixels_w):
    """(H, W, 1) float32 numpy array of 1 / (number of patches covering pixel)."""
    p, H, W = patch_w, pixels_h, pixels_w
    assert H >= p and W >= p, "every pixel must be covered by >= 1 patch"
    H_out, W_out = H - p + 1, W - p + 1
    cnt = np.zeros((H, W), np.float32)
    for kh in range(p):
        for kw in range(p):
            cnt[kh:kh + H_out, kw:kw + W_out] += 1.0
    assert cnt.min() > 0.0
    return (1.0 / cnt)[:, :, None]


def aggregation0_forward(x, pixels_h, pixels_w, patch_w):
    """x: (images, patches, hor_f, ver_f) -> same shape (overlap-averaged patches)."""
    images, patches, hor_f, ver_f = x.shape
    p = patch_w
    C = ver_f // (p * p)
    assert ver_f == C * p * p
    H, W = pixels_h, pixels_w
    assert H >= p and W >= p
    H_out, W_out = H - p + 1, W - p + 1
    assert patches == H_out * W_out
    L = patches

    M = images * hor_f * C           # batch rows -> lane dimension
    TM = 128                         # lane tile (full vreg lane width)
    Mpad = ((M + TM - 1) // TM) * TM

    # ---- layout glue: (images, patches, hor_f, ver_f) -> (p*p, H_out, W_out, Mpad)
    # torch: x.permute(0,2,3,1).view(images*hor_f, C*p*p, L); ver_f splits as (C, p, p),
    # L splits as (H_out, W_out).  Batch index packs as (images, hor_f, C).
    xk = jnp.transpose(x, (0, 2, 3, 1))                              # (img, hor_f, ver_f, L)
    xk = xk.reshape(images, hor_f, C, p, p, H_out, W_out)
    xk = jnp.transpose(xk, (3, 4, 5, 6, 0, 1, 2))                    # (p, p, Ho, Wo, img, hor_f, C)
    xk = xk.reshape(p * p, H_out, W_out, M).astype(jnp.float32)
    if Mpad != M:
        xk = jnp.pad(xk, ((0, 0), (0, 0), (0, 0), (0, Mpad - M)))

    inv_cnt = jnp.asarray(_inv_coverage_count(p, H, W))              # (H, W, 1) f32

    kernel = _make_agg0_kernel(p, H, W)
    out = pl.pallas_call(
        kernel,
        out_shape=jax.ShapeDtypeStruct((p * p, H_out, W_out, Mpad), jnp.float32),
        grid_spec=pltpu.PrefetchScalarGridSpec(
            num_scalar_prefetch=0,
            grid=(Mpad // TM,),
            in_specs=[
                pl.BlockSpec((p * p, H_out, W_out, TM), lambda m: (0, 0, 0, m)),
                pl.BlockSpec((H, W, 1), lambda m: (0, 0, 0)),
            ],
            out_specs=pl.BlockSpec((p * p, H_out, W_out, TM), lambda m: (0, 0, 0, m)),
            scratch_shapes=[pltpu.VMEM((H, W, TM), jnp.float32)],
        ),
        compiler_params=pltpu.CompilerParams(dimension_semantics=("parallel",)),
    )(xk, inv_cnt)

    # ---- layout glue back: (p*p, H_out, W_out, Mpad) -> (images, patches, hor_f, ver_f)
    out = out[..., :M]
    out = out.reshape(p, p, H_out, W_out, images, hor_f, C)
    out = jnp.transpose(out, (4, 5, 6, 0, 1, 2, 3))                  # (img, hor_f, C, p, p, Ho, Wo)
    out = out.reshape(images, hor_f, ver_f, L)
    out = jnp.transpose(out, (0, 3, 1, 2))                           # (img, patches, hor_f, ver_f)
    return out.astype(x.dtype)


# ----------------------------------------------------------------------------
# Pure-JAX reference of the torch fold/unfold semantics (sanity check)
# ----------------------------------------------------------------------------
def aggregation0_reference(x, pixels_h, pixels_w, patch_w):
    images, patches, hor_f, ver_f = x.shape
    p = patch_w
    C = ver_f // (p * p)
    H_out, W_out = pixels_h - p + 1, pixels_w - p + 1
    B = images * hor_f
    xb = jnp.transpose(x, (0, 2, 3, 1)).reshape(B, ver_f, patches).astype(jnp.float32)
    xb6 = xb.reshape(B, C, p, p, H_out, W_out)
    img = jnp.zeros((B, C, pixels_h, pixels_w), jnp.float32)
    cnt = jnp.zeros((pixels_h, pixels_w), jnp.float32)
    for kh in range(p):
        for kw in range(p):
            img = img.at[:, :, kh:kh + H_out, kw:kw + W_out].add(xb6[:, :, kh, kw])
            cnt = cnt.at[kh:kh + H_out, kw:kw + W_out].add(1.0)
    img = img / cnt
    out = jnp.stack([img[:, :, kh:kh + H_out, kw:kw + W_out].reshape(B, C, patches)
                     for kh in range(p) for kw in range(p)], axis=2)   # (B, C, p*p, L)
    out = out.reshape(B, ver_f, patches)
    out = out.reshape(images, hor_f, ver_f, patches).transpose(0, 3, 1, 2)
    return out.astype(x.dtype)


if __name__ == "__main__":
    patch_w = 3
    pixels_h = pixels_w = 16
    images, hor_f, C = 2, 4, 3                       # C=3 exercises the RGB channel split
    ver_f = C * patch_w * patch_w                    # 27
    patches = (pixels_h - patch_w + 1) * (pixels_w - patch_w + 1)   # 196

    key = jax.random.PRNGKey(0)
    x = jax.random.normal(key, (images, patches, hor_f, ver_f), dtype=jnp.float32)

    out = aggregation0_forward(x, pixels_h, pixels_w, patch_w)
    out = jax.block_until_ready(out)

    ref = aggregation0_reference(x, pixels_h, pixels_w, patch_w)
    assert out.shape == x.shape
    max_err = float(jnp.max(jnp.abs(out - ref)))
    assert max_err < 1e-5, f"mismatch vs reference: max abs err {max_err}"

    print("KERNEL_OK")
</pallas_src>

<mosaic_0001>
module attributes {stable_mosaic.version = 11 : i64} {
  func.func @kernel(%arg0: i32, %arg1: memref<9x14x14x128xf32, #tpu.memory_space<vmem>>, %arg2: memref<16x16x1xf32, #tpu.memory_space<vmem>>, %arg3: memref<9x14x14x128xf32, #tpu.memory_space<vmem>>, %arg4: memref<16x16x128xf32, #tpu.memory_space<vmem>>) attributes {dimension_semantics = [#tpu.dimension_semantics<parallel>], iteration_bounds = array<i64: 1>, scalar_prefetch = 0 : i64, scratch_operands = 1 : i64, tpu.core_type = #tpu.core_type<tc>, window_params = [{transform_indices = @transform_0, window_bounds = array<i64: 9, 14, 14, 128>}, {pipeline_mode = #tpu.pipeline_mode<synchronous>, transform_indices = @transform_1, window_bounds = array<i64: 16, 16, 1>}, {transform_indices = @transform_2, window_bounds = array<i64: 9, 14, 14, 128>}]} {
    %cst = arith.constant 0.000000e+00 : f32
    %0 = vector.broadcast %cst : f32 to vector<16x16x128xf32>
    %c0 = arith.constant 0 : index
    %c0_0 = arith.constant 0 : index
    %c0_1 = arith.constant 0 : index
    %1 = vector.load %arg4[%c0, %c0_0, %c0_1] : memref<16x16x128xf32, #tpu.memory_space<vmem>>, vector<16x16x128xf32>
    tpu.vector_store %arg4[%c0, %c0_0, %c0_1], %0 {strides = array<i32>} : memref<16x16x128xf32, #tpu.memory_space<vmem>>, vector<16x16x128xf32>,
    %c0_2 = arith.constant 0 : index
    %c0_3 = arith.constant 0 : index
    %c0_4 = arith.constant 0 : index
    %2 = vector.load %arg4[%c0_2, %c0_3, %c0_4] : memref<16x16x128xf32, #tpu.memory_space<vmem>>, vector<14x14x128xf32>
    %c0_5 = arith.constant 0 : index
    %c0_6 = arith.constant 0 : index
    %c0_7 = arith.constant 0 : index
    %c0_8 = arith.constant 0 : index
    %3 = vector.load %arg1[%c0_5, %c0_6, %c0_7, %c0_8] : memref<9x14x14x128xf32, #tpu.memory_space<vmem>>, vector<1x14x14x128xf32>
    %4 = vector.shape_cast %3 : vector<1x14x14x128xf32> to vector<14x14x128xf32>
    %5 = arith.addf %2, %4 : vector<14x14x128xf32>
    %c0_9 = arith.constant 0 : index
    %c0_10 = arith.constant 0 : index
    %c0_11 = arith.constant 0 : index
    %6 = vector.load %arg4[%c0_9, %c0_10, %c0_11] : memref<16x16x128xf32, #tpu.memory_space<vmem>>, vector<14x14x128xf32>
    tpu.vector_store %arg4[%c0_9, %c0_10, %c0_11], %5 {strides = array<i32>} : memref<16x16x128xf32, #tpu.memory_space<vmem>>, vector<14x14x128xf32>,
    %c0_12 = arith.constant 0 : index
    %c1 = arith.constant 1 : index
    %c0_13 = arith.constant 0 : index
    %7 = vector.load %arg4[%c0_12, %c1, %c0_13] : memref<16x16x128xf32, #tpu.memory_space<vmem>>, vector<14x14x128xf32>
    %c1_14 = arith.constant 1 : index
    %c0_15 = arith.constant 0 : index
    %c0_16 = arith.constant 0 : index
    %c0_17 = arith.constant 0 : index
    %8 = vector.load %arg1[%c1_14, %c0_15, %c0_16, %c0_17] : memref<9x14x14x128xf32, #tpu.memory_space<vmem>>, vector<1x14x14x128xf32>
    %9 = vector.shape_cast %8 : vector<1x14x14x128xf32> to vector<14x14x128xf32>
    %10 = arith.addf %7, %9 : vector<14x14x128xf32>
    %c0_18 = arith.constant 0 : index
    %c1_19 = arith.constant 1 : index
    %c0_20 = arith.constant 0 : index
    %11 = vector.load %arg4[%c0_18, %c1_19, %c0_20] : memref<16x16x128xf32, #tpu.memory_space<vmem>>, vector<14x14x128xf32>
    tpu.vector_store %arg4[%c0_18, %c1_19, %c0_20], %10 {strides = array<i32>} : memref<16x16x128xf32, #tpu.memory_space<vmem>>, vector<14x14x128xf32>,
    %c0_21 = arith.constant 0 : index
    %c2 = arith.constant 2 : index
    %c0_22 = arith.constant 0 : index
    %12 = vector.load %arg4[%c0_21, %c2, %c0_22] : memref<16x16x128xf32, #tpu.memory_space<vmem>>, vector<14x14x128xf32>
    %c2_23 = arith.constant 2 : index
    %c0_24 = arith.constant 0 : index
    %c0_25 = arith.constant 0 : index
    %c0_26 = arith.constant 0 : index
    %13 = vector.load %arg1[%c2_23, %c0_24, %c0_25, %c0_26] : memref<9x14x14x128xf32, #tpu.memory_space<vmem>>, vector<1x14x14x128xf32>
    %14 = vector.shape_cast %13 : vector<1x14x14x128xf32> to vector<14x14x128xf32>
    %15 = arith.addf %12, %14 : vector<14x14x128xf32>
    %c0_27 = arith.constant 0 : index
    %c2_28 = arith.constant 2 : index
    %c0_29 = arith.constant 0 : index
    %16 = vector.load %arg4[%c0_27, %c2_28, %c0_29] : memref<16x16x128xf32, #tpu.memory_space<vmem>>, vector<14x14x128xf32>
    tpu.vector_store %arg4[%c0_27, %c2_28, %c0_29], %15 {strides = array<i32>} : memref<16x16x128xf32, #tpu.memory_space<vmem>>, vector<14x14x128xf32>,
    %c1_30 = arith.constant 1 : index
    %c0_31 = arith.constant 0 : index
    %c0_32 = arith.constant 0 : index
    %17 = vector.load %arg4[%c1_30, %c0_31, %c0_32] : memref<16x16x128xf32, #tpu.memory_space<vmem>>, vector<14x14x128xf32>
    %c3 = arith.constant 3 : index
    %c0_33 = arith.constant 0 : index
    %c0_34 = arith.constant 0 : index
    %c0_35 = arith.constant 0 : index
    %18 = vector.load %arg1[%c3, %c0_33, %c0_34, %c0_35] : memref<9x14x14x128xf32, #tpu.memory_space<vmem>>, vector<1x14x14x128xf32>
    %19 = vector.shape_cast %18 : vector<1x14x14x128xf32> to vector<14x14x128xf32>
    %20 = arith.addf %17, %19 : vector<14x14x128xf32>
    %c1_36 = arith.constant 1 : index
    %c0_37 = arith.constant 0 : index
    %c0_38 = arith.constant 0 : index
    %21 = vector.load %arg4[%c1_36, %c0_37, %c0_38] : memref<16x16x128xf32, #tpu.memory_space<vmem>>, vector<14x14x128xf32>
    tpu.vector_store %arg4[%c1_36, %c0_37, %c0_38], %20 {strides = array<i32>} : memref<16x16x128xf32, #tpu.memory_space<vmem>>, vector<14x14x128xf32>,
    %c1_39 = arith.constant 1 : index
    %c1_40 = arith.constant 1 : index
    %c0_41 = arith.constant 0 : index
    %22 = vector.load %arg4[%c1_39, %c1_40, %c0_41] : memref<16x16x128xf32, #tpu.memory_space<vmem>>, vector<14x14x128xf32>
    %c4 = arith.constant 4 : index
    %c0_42 = arith.constant 0 : index
    %c0_43 = arith.constant 0 : index
    %c0_44 = arith.constant 0 : index
    %23 = vector.load %arg1[%c4, %c0_42, %c0_43, %c0_44] : memref<9x14x14x128xf32, #tpu.memory_space<vmem>>, vector<1x14x14x128xf32>
    %24 = vector.shape_cast %23 : vector<1x14x14x128xf32> to vector<14x14x128xf32>
    %25 = arith.addf %22, %24 : vector<14x14x128xf32>
    %c1_45 = arith.constant 1 : index
    %c1_46 = arith.constant 1 : index
    %c0_47 = arith.constant 0 : index
    %26 = vector.load %arg4[%c1_45, %c1_46, %c0_47] : memref<16x16x128xf32, #tpu.memory_space<vmem>>, vector<14x14x128xf32>
    tpu.vector_store %arg4[%c1_45, %c1_46, %c0_47], %25 {strides = array<i32>} : memref<16x16x128xf32, #tpu.memory_space<vmem>>, vector<14x14x128xf32>,
    %c1_48 = arith.constant 1 : index
    %c2_49 = arith.constant 2 : index
    %c0_50 = arith.constant 0 : index
    %27 = vector.load %arg4[%c1_48, %c2_49, %c0_50] : memref<16x16x128xf32, #tpu.memory_space<vmem>>, vector<14x14x128xf32>
    %c5 = arith.constant 5 : index
    %c0_51 = arith.constant 0 : index
    %c0_52 = arith.constant 0 : index
    %c0_53 = arith.constant 0 : index
    %28 = vector.load %arg1[%c5, %c0_51, %c0_52, %c0_53] : memref<9x14x14x128xf32, #tpu.memory_space<vmem>>, vector<1x14x14x128xf32>
    %29 = vector.shape_cast %28 : vector<1x14x14x128xf32> to vector<14x14x128xf32>
    %30 = arith.addf %27, %29 : vector<14x14x128xf32>
    %c1_54 = arith.constant 1 : index
    %c2_55 = arith.constant 2 : index
    %c0_56 = arith.constant 0 : index
    %31 = vector.load %arg4[%c1_54, %c2_55, %c0_56] : memref<16x16x128xf32, #tpu.memory_space<vmem>>, vector<14x14x128xf32>
    tpu.vector_store %arg4[%c1_54, %c2_55, %c0_56], %30 {strides = array<i32>} : memref<16x16x128xf32, #tpu.memory_space<vmem>>, vector<14x14x128xf32>,
    %c2_57 = arith.constant 2 : index
    %c0_58 = arith.constant 0 : index
    %c0_59 = arith.constant 0 : index
    %32 = vector.load %arg4[%c2_57, %c0_58, %c0_59] : memref<16x16x128xf32, #tpu.memory_space<vmem>>, vector<14x14x128xf32>
    %c6 = arith.constant 6 : index
    %c0_60 = arith.constant 0 : index
    %c0_61 = arith.constant 0 : index
    %c0_62 = arith.constant 0 : index
    %33 = vector.load %arg1[%c6, %c0_60, %c0_61, %c0_62] : memref<9x14x14x128xf32, #tpu.memory_space<vmem>>, vector<1x14x14x128xf32>
    %34 = vector.shape_cast %33 : vector<1x14x14x128xf32> to vector<14x14x128xf32>
    %35 = arith.addf %32, %34 : vector<14x14x128xf32>
    %c2_63 = arith.constant 2 : index
    %c0_64 = arith.constant 0 : index
    %c0_65 = arith.constant 0 : index
    %36 = vector.load %arg4[%c2_63, %c0_64, %c0_65] : memref<16x16x128xf32, #tpu.memory_space<vmem>>, vector<14x14x128xf32>
    tpu.vector_store %arg4[%c2_63, %c0_64, %c0_65], %35 {strides = array<i32>} : memref<16x16x128xf32, #tpu.memory_space<vmem>>, vector<14x14x128xf32>,
    %c2_66 = arith.constant 2 : index
    %c1_67 = arith.constant 1 : index
    %c0_68 = arith.constant 0 : index
    %37 = vector.load %arg4[%c2_66, %c1_67, %c0_68] : memref<16x16x128xf32, #tpu.memory_space<vmem>>, vector<14x14x128xf32>
    %c7 = arith.constant 7 : index
    %c0_69 = arith.constant 0 : index
    %c0_70 = arith.constant 0 : index
    %c0_71 = arith.constant 0 : index
    %38 = vector.load %arg1[%c7, %c0_69, %c0_70, %c0_71] : memref<9x14x14x128xf32, #tpu.memory_space<vmem>>, vector<1x14x14x128xf32>
    %39 = vector.shape_cast %38 : vector<1x14x14x128xf32> to vector<14x14x128xf32>
    %40 = arith.addf %37, %39 : vector<14x14x128xf32>
    %c2_72 = arith.constant 2 : index
    %c1_73 = arith.constant 1 : index
    %c0_74 = arith.constant 0 : index
    %41 = vector.load %arg4[%c2_72, %c1_73, %c0_74] : memref<16x16x128xf32, #tpu.memory_space<vmem>>, vector<14x14x128xf32>
    tpu.vector_store %arg4[%c2_72, %c1_73, %c0_74], %40 {strides = array<i32>} : memref<16x16x128xf32, #tpu.memory_space<vmem>>, vector<14x14x128xf32>,
    %c2_75 = arith.constant 2 : index
    %c2_76 = arith.constant 2 : index
    %c0_77 = arith.constant 0 : index
    %42 = vector.load %arg4[%c2_75, %c2_76, %c0_77] : memref<16x16x128xf32, #tpu.memory_space<vmem>>, vector<14x14x128xf32>
    %c8 = arith.constant 8 : index
    %c0_78 = arith.constant 0 : index
    %c0_79 = arith.constant 0 : index
    %c0_80 = arith.constant 0 : index
    %43 = vector.load %arg1[%c8, %c0_78, %c0_79, %c0_80] : memref<9x14x14x128xf32, #tpu.memory_space<vmem>>, vector<1x14x14x128xf32>
    %44 = vector.shape_cast %43 : vector<1x14x14x128xf32> to vector<14x14x128xf32>
    %45 = arith.addf %42, %44 : vector<14x14x128xf32>
    %c2_81 = arith.constant 2 : index
    %c2_82 = arith.constant 2 : index
    %c0_83 = arith.constant 0 : index
    %46 = vector.load %arg4[%c2_81, %c2_82, %c0_83] : memref<16x16x128xf32, #tpu.memory_space<vmem>>, vector<14x14x128xf32>
    tpu.vector_store %arg4[%c2_81, %c2_82, %c0_83], %45 {strides = array<i32>} : memref<16x16x128xf32, #tpu.memory_space<vmem>>, vector<14x14x128xf32>,
    %c0_84 = arith.constant 0 : index
    %c0_85 = arith.constant 0 : index
    %c0_86 = arith.constant 0 : index
    %47 = vector.load %arg4[%c0_84, %c0_85, %c0_86] : memref<16x16x128xf32, #tpu.memory_space<vmem>>, vector<16x16x128xf32>
    %c0_87 = arith.constant 0 : index
    %c0_88 = arith.constant 0 : index
    %c0_89 = arith.constant 0 : index
    %48 = vector.load %arg2[%c0_87, %c0_88, %c0_89] : memref<16x16x1xf32, #tpu.memory_space<vmem>>, vector<16x16x1xf32>
    %49 = vector.broadcast %48 : vector<16x16x1xf32> to vector<16x16x128xf32>
    %50 = arith.mulf %47, %49 : vector<16x16x128xf32>
    %c0_90 = arith.constant 0 : index
    %c0_91 = arith.constant 0 : index
    %c0_92 = arith.constant 0 : index
    %51 = vector.load %arg4[%c0_90, %c0_91, %c0_92] : memref<16x16x128xf32, #tpu.memory_space<vmem>>, vector<16x16x128xf32>
    tpu.vector_store %arg4[%c0_90, %c0_91, %c0_92], %50 {strides = array<i32>} : memref<16x16x128xf32, #tpu.memory_space<vmem>>, vector<16x16x128xf32>,
    %c0_93 = arith.constant 0 : index
    %c0_94 = arith.constant 0 : index
    %c0_95 = arith.constant 0 : index
    %52 = vector.load %arg4[%c0_93, %c0_94, %c0_95] : memref<16x16x128xf32, #tpu.memory_space<vmem>>, vector<14x14x128xf32>
    %c0_96 = arith.constant 0 : index
    %c0_97 = arith.constant 0 : index
    %c0_98 = arith.constant 0 : index
    %c0_99 = arith.constant 0 : index
    %53 = vector.load %arg3[%c0_96, %c0_97, %c0_98, %c0_99] : memref<9x14x14x128xf32, #tpu.memory_space<vmem>>, vector<1x14x14x128xf32>
    %54 = vector.shape_cast %53 : vector<1x14x14x128xf32> to vector<14x14x128xf32>
    %55 = vector.shape_cast %52 : vector<14x14x128xf32> to vector<1x14x14x128xf32>
    tpu.vector_store %arg3[%c0_96, %c0_97, %c0_98, %c0_99], %55 {strides = array<i32>} : memref<9x14x14x128xf32, #tpu.memory_space<vmem>>, vector<1x14x14x128xf32>,
    %c0_100 = arith.constant 0 : index
    %c1_101 = arith.constant 1 : index
    %c0_102 = arith.constant 0 : index
    %56 = vector.load %arg4[%c0_100, %c1_101, %c0_102] : memref<16x16x128xf32, #tpu.memory_space<vmem>>, vector<14x14x128xf32>
    %c1_103 = arith.constant 1 : index
    %c0_104 = arith.constant 0 : index
    %c0_105 = arith.constant 0 : index
    %c0_106 = arith.constant 0 : index
    %57 = vector.load %arg3[%c1_103, %c0_104, %c0_105, %c0_106] : memref<9x14x14x128xf32, #tpu.memory_space<vmem>>, vector<1x14x14x128xf32>
    %58 = vector.shape_cast %57 : vector<1x14x14x128xf32> to vector<14x14x128xf32>
    %59 = vector.shape_cast %56 : vector<14x14x128xf32> to vector<1x14x14x128xf32>
    tpu.vector_store %arg3[%c1_103, %c0_104, %c0_105, %c0_106], %59 {strides = array<i32>} : memref<9x14x14x128xf32, #tpu.memory_space<vmem>>, vector<1x14x14x128xf32>,
    %c0_107 = arith.constant 0 : index
    %c2_108 = arith.constant 2 : index
    %c0_109 = arith.constant 0 : index
    %60 = vector.load %arg4[%c0_107, %c2_108, %c0_109] : memref<16x16x128xf32, #tpu.memory_space<vmem>>, vector<14x14x128xf32>
    %c2_110 = arith.constant 2 : index
    %c0_111 = arith.constant 0 : index
    %c0_112 = arith.constant 0 : index
    %c0_113 = arith.constant 0 : index
    %61 = vector.load %arg3[%c2_110, %c0_111, %c0_112, %c0_113] : memref<9x14x14x128xf32, #tpu.memory_space<vmem>>, vector<1x14x14x128xf32>
    %62 = vector.shape_cast %61 : vector<1x14x14x128xf32> to vector<14x14x128xf32>
    %63 = vector.shape_cast %60 : vector<14x14x128xf32> to vector<1x14x14x128xf32>
    tpu.vector_store %arg3[%c2_110, %c0_111, %c0_112, %c0_113], %63 {strides = array<i32>} : memref<9x14x14x128xf32, #tpu.memory_space<vmem>>, vector<1x14x14x128xf32>,
    %c1_114 = arith.constant 1 : index
    %c0_115 = arith.constant 0 : index
    %c0_116 = arith.constant 0 : index
    %64 = vector.load %arg4[%c1_114, %c0_115, %c0_116] : memref<16x16x128xf32, #tpu.memory_space<vmem>>, vector<14x14x128xf32>
    %c3_117 = arith.constant 3 : index
    %c0_118 = arith.constant 0 : index
    %c0_119 = arith.constant 0 : index
    %c0_120 = arith.constant 0 : index
    %65 = vector.load %arg3[%c3_117, %c0_118, %c0_119, %c0_120] : memref<9x14x14x128xf32, #tpu.memory_space<vmem>>, vector<1x14x14x128xf32>
    %66 = vector.shape_cast %65 : vector<1x14x14x128xf32> to vector<14x14x128xf32>
    %67 = vector.shape_cast %64 : vector<14x14x128xf32> to vector<1x14x14x128xf32>
    tpu.vector_store %arg3[%c3_117, %c0_118, %c0_119, %c0_120], %67 {strides = array<i32>} : memref<9x14x14x128xf32, #tpu.memory_space<vmem>>, vector<1x14x14x128xf32>,
    %c1_121 = arith.constant 1 : index
    %c1_122 = arith.constant 1 : index
    %c0_123 = arith.constant 0 : index
    %68 = vector.load %arg4[%c1_121, %c1_122, %c0_123] : memref<16x16x128xf32, #tpu.memory_space<vmem>>, vector<14x14x128xf32>
    %c4_124 = arith.constant 4 : index
    %c0_125 = arith.constant 0 : index
    %c0_126 = arith.constant 0 : index
    %c0_127 = arith.constant 0 : index
    %69 = vector.load %arg3[%c4_124, %c0_125, %c0_126, %c0_127] : memref<9x14x14x128xf32, #tpu.memory_space<vmem>>, vector<1x14x14x128xf32>
    %70 = vector.shape_cast %69 : vector<1x14x14x128xf32> to vector<14x14x128xf32>
    %71 = vector.shape_cast %68 : vector<14x14x128xf32> to vector<1x14x14x128xf32>
    tpu.vector_store %arg3[%c4_124, %c0_125, %c0_126, %c0_127], %71 {strides = array<i32>} : memref<9x14x14x128xf32, #tpu.memory_space<vmem>>, vector<1x14x14x128xf32>,
    %c1_128 = arith.constant 1 : index
    %c2_129 = arith.constant 2 : index
    %c0_130 = arith.constant 0 : index
    %72 = vector.load %arg4[%c1_128, %c2_129, %c0_130] : memref<16x16x128xf32, #tpu.memory_space<vmem>>, vector<14x14x128xf32>
    %c5_131 = arith.constant 5 : index
    %c0_132 = arith.constant 0 : index
    %c0_133 = arith.constant 0 : index
    %c0_134 = arith.constant 0 : index
    %73 = vector.load %arg3[%c5_131, %c0_132, %c0_133, %c0_134] : memref<9x14x14x128xf32, #tpu.memory_space<vmem>>, vector<1x14x14x128xf32>
    %74 = vector.shape_cast %73 : vector<1x14x14x128xf32> to vector<14x14x128xf32>
    %75 = vector.shape_cast %72 : vector<14x14x128xf32> to vector<1x14x14x128xf32>
    tpu.vector_store %arg3[%c5_131, %c0_132, %c0_133, %c0_134], %75 {strides = array<i32>} : memref<9x14x14x128xf32, #tpu.memory_space<vmem>>, vector<1x14x14x128xf32>,
    %c2_135 = arith.constant 2 : index
    %c0_136 = arith.constant 0 : index
    %c0_137 = arith.constant 0 : index
    %76 = vector.load %arg4[%c2_135, %c0_136, %c0_137] : memref<16x16x128xf32, #tpu.memory_space<vmem>>, vector<14x14x128xf32>
    %c6_138 = arith.constant 6 : index
    %c0_139 = arith.constant 0 : index
    %c0_140 = arith.constant 0 : index
    %c0_141 = arith.constant 0 : index
    %77 = vector.load %arg3[%c6_138, %c0_139, %c0_140, %c0_141] : memref<9x14x14x128xf32, #tpu.memory_space<vmem>>, vector<1x14x14x128xf32>
    %78 = vector.shape_cast %77 : vector<1x14x14x128xf32> to vector<14x14x128xf32>
    %79 = vector.shape_cast %76 : vector<14x14x128xf32> to vector<1x14x14x128xf32>
    tpu.vector_store %arg3[%c6_138, %c0_139, %c0_140, %c0_141], %79 {strides = array<i32>} : memref<9x14x14x128xf32, #tpu.memory_space<vmem>>, vector<1x14x14x128xf32>,
    %c2_142 = arith.constant 2 : index
    %c1_143 = arith.constant 1 : index
    %c0_144 = arith.constant 0 : index
    %80 = vector.load %arg4[%c2_142, %c1_143, %c0_144] : memref<16x16x128xf32, #tpu.memory_space<vmem>>, vector<14x14x128xf32>
    %c7_145 = arith.constant 7 : index
    %c0_146 = arith.constant 0 : index
    %c0_147 = arith.constant 0 : index
    %c0_148 = arith.constant 0 : index
    %81 = vector.load %arg3[%c7_145, %c0_146, %c0_147, %c0_148] : memref<9x14x14x128xf32, #tpu.memory_space<vmem>>, vector<1x14x14x128xf32>
    %82 = vector.shape_cast %81 : vector<1x14x14x128xf32> to vector<14x14x128xf32>
    %83 = vector.shape_cast %80 : vector<14x14x128xf32> to vector<1x14x14x128xf32>
    tpu.vector_store %arg3[%c7_145, %c0_146, %c0_147, %c0_148], %83 {strides = array<i32>} : memref<9x14x14x128xf32, #tpu.memory_space<vmem>>, vector<1x14x14x128xf32>,
    %c2_149 = arith.constant 2 : index
    %c2_150 = arith.constant 2 : index
    %c0_151 = arith.constant 0 : index
    %84 = vector.load %arg4[%c2_149, %c2_150, %c0_151] : memref<16x16x128xf32, #tpu.memory_space<vmem>>, vector<14x14x128xf32>
    %c8_152 = arith.constant 8 : index
    %c0_153 = arith.constant 0 : index
    %c0_154 = arith.constant 0 : index
    %c0_155 = arith.constant 0 : index
    %85 = vector.load %arg3[%c8_152, %c0_153, %c0_154, %c0_155] : memref<9x14x14x128xf32, #tpu.memory_space<vmem>>, vector<1x14x14x128xf32>
    %86 = vector.shape_cast %85 : vector<1x14x14x128xf32> to vector<14x14x128xf32>
    %87 = vector.shape_cast %84 : vector<14x14x128xf32> to vector<1x14x14x128xf32>
    tpu.vector_store %arg3[%c8_152, %c0_153, %c0_154, %c0_155], %87 {strides = array<i32>} : memref<9x14x14x128xf32, #tpu.memory_space<vmem>>, vector<1x14x14x128xf32>,
    return
  }
  func.func @transform_0(%arg0: i32) -> (i32, i32, i32, i32) {
    %c0_i32 = arith.constant 0 : i32
    %c0_i32_0 = arith.constant 0 : i32
    %c0_i32_1 = arith.constant 0 : i32
    %c0_i32_2 = arith.constant 0 : i32
    return %c0_i32, %c0_i32_0, %c0_i32_1, %arg0 : i32, i32, i32, i32
  }
  func.func @transform_1(%arg0: i32) -> (i32, i32, i32) {
    %c0_i32 = arith.constant 0 : i32
    %c0_i32_0 = arith.constant 0 : i32
    %c0_i32_1 = arith.constant 0 : i32
    %c0_i32_2 = arith.constant 0 : i32
    return %c0_i32, %c0_i32_0, %c0_i32_1 : i32, i32, i32
  }
  func.func @transform_2(%arg0: i32) -> (i32, i32, i32, i32) {
    %c0_i32 = arith.constant 0 : i32
    %c0_i32_0 = arith.constant 0 : i32
    %c0_i32_1 = arith.constant 0 : i32
    %c0_i32_2 = arith.constant 0 : i32
    return %c0_i32, %c0_i32_0, %c0_i32_1, %arg0 : i32, i32, i32, i32
  }
}

</mosaic_0001>

<llo_original>
// kernel: tpu_custom_call.1
$region0: #{tpu_custom_call.1}
  #allocation0 [shape = 'u32[]', space=smem, size = 0x4, offset = 0x4, fixed_abs, tag = 'smem constant byte address 0x4 - core index']
  #allocation1 [shape = 'u32[144,128]{1,0:T(1,128)}', space=vmem, size = 0x12000, scoped, tag = 'internal scratch']
  #allocation2 [shape = 'f32[16,16,128]{2,1,0:T(8,128)}', space=vmem, size = 0x20000, scoped, tag = 'scratch operand']
  %s0 = inlined_call_operand.hbm [shape: f32[9,14,14,128], index: 0, kind: input, shape index: {}]
  %s1 = inlined_call_operand.vmem [shape: f32[16,16,1], index: 1, kind: input, shape index: {}]
  %s2 = inlined_call_operand.hbm [shape: f32[9,14,14,128], index: 2, kind: output, shape index: {}]
  %s3 = sld [smem:[#allocation0]]
  $region22: #{tpu_custom_call.1} parent=0
    _
  %s5 = ssub.s32 1, %s3
  %s6 = scalar_select 0, %s5, %s3
  $region1: #{tpu_custom_call.1} parent=0
    #allocation3 [shape = 'u8[1032192]{0}', space=vmem, size = 0xfc000, scoped, tag = 'input window, operand 0, single buffered']
    #allocation4 [shape = 's32[1]{0}', space=sflag, size = 0x4, scoped, tag = 'scoped memory for tpu_custom_call.1']
    #allocation5 [shape = 's32[1]{0}', space=sflag, size = 0x4, scoped, tag = 'scoped memory for tpu_custom_call.1']
    #allocation6 [shape = 'u8[1032192]{0}', space=vmem, size = 0xfc000, scoped, tag = 'output window, operand 0, single buffered']
    %7 = vsyncpa [#allocation4], 0
    %8 = vsyncpa [#allocation5], 0
    // Predicated region
    $region2: #{tpu_custom_call.1} parent=1 // pred_check
      _
    $region3: #{tpu_custom_call.1} parent=1 // pred_check_branch
      %10 = sbr.rel (0) target = $region5
    $region4: #{tpu_custom_call.1} parent=1 // pred_region
      %s12 = ssub.s32 32256, 32256
      %13 = vsyncadd [#allocation4], %s12
      %s14 = sshll.u32 [#allocation3], 4
      %s15 = int_to_ptr.vmem [resolvable:$true] %s14
      %20 = dma.hbm_to_vmem [thread:$0]  %s0, 32256, %s15, [#allocation4], 128, 128, 8
    $region5: #{tpu_custom_call.1} parent=1 // pred_fallthru
      _
    // Predicated region
    $region6: #{tpu_custom_call.1} parent=1 // pred_check
      _
    $region7: #{tpu_custom_call.1} parent=1 // pred_check_branch
      %22 = sbr.rel (0) target = $region9
    $region8: #{tpu_custom_call.1} parent=1 // pred_region
      _
    $region9: #{tpu_custom_call.1} parent=1 // pred_fallthru
      _
    // Predicated region
    $region10: #{tpu_custom_call.1} parent=1 // pred_check
      _
    $region11: #{tpu_custom_call.1} parent=1 // pred_check_branch
      %24 = sbr.rel (0) target = $region13
    $region12: #{tpu_custom_call.1} parent=1 // pred_region
      %25 = dma.done [#allocation4], 32256
    $region13: #{tpu_custom_call.1} parent=1 // pred_fallthru
      _
    %26 = vst [vmem:[#allocation2] sm:$0xff] 0.0
    %27 = vst [vmem:[#allocation2 + $0x8] sm:$0xff] 0.0
    %28 = vst [vmem:[#allocation2 + $0x10] sm:$0xff] 0.0
    %29 = vst [vmem:[#allocation2 + $0x18] sm:$0xff] 0.0
    %30 = vst [vmem:[#allocation2 + $0x20] sm:$0xff] 0.0
    %31 = vst [vmem:[#allocation2 + $0x28] sm:$0xff] 0.0
    %32 = vst [vmem:[#allocation2 + $0x30] sm:$0xff] 0.0
    %33 = vst [vmem:[#allocation2 + $0x38] sm:$0xff] 0.0
    %34 = vst [vmem:[#allocation2 + $0x40] sm:$0xff] 0.0
    %35 = vst [vmem:[#allocation2 + $0x48] sm:$0xff] 0.0
    %36 = vst [vmem:[#allocation2 + $0x50] sm:$0xff] 0.0
    %37 = vst [vmem:[#allocation2 + $0x58] sm:$0xff] 0.0
    %38 = vst [vmem:[#allocation2 + $0x60] sm:$0xff] 0.0
    %39 = vst [vmem:[#allocation2 + $0x68] sm:$0xff] 0.0
    %40 = vst [vmem:[#allocation2 + $0x70] sm:$0xff] 0.0
    %41 = vst [vmem:[#allocation2 + $0x78] sm:$0xff] 0.0
    %42 = vst [vmem:[#allocation2 + $0x80] sm:$0xff] 0.0
    %43 = vst [vmem:[#allocation2 + $0x88] sm:$0xff] 0.0
    %44 = vst [vmem:[#allocation2 + $0x90] sm:$0xff] 0.0
    %45 = vst [vmem:[#allocation2 + $0x98] sm:$0xff] 0.0
    %46 = vst [vmem:[#allocation2 + $0xa0] sm:$0xff] 0.0
    %47 = vst [vmem:[#allocation2 + $0xa8] sm:$0xff] 0.0
    %48 = vst [vmem:[#allocation2 + $0xb0] sm:$0xff] 0.0
    %49 = vst [vmem:[#allocation2 + $0xb8] sm:$0xff] 0.0
    %50 = vst [vmem:[#allocation2 + $0xc0] sm:$0xff] 0.0
    %51 = vst [vmem:[#allocation2 + $0xc8] sm:$0xff] 0.0
    %52 = vst [vmem:[#allocation2 + $0xd0] sm:$0xff] 0.0
    %53 = vst [vmem:[#allocation2 + $0xd8] sm:$0xff] 0.0
    %54 = vst [vmem:[#allocation2 + $0xe0] sm:$0xff] 0.0
    %55 = vst [vmem:[#allocation2 + $0xe8] sm:$0xff] 0.0
    %56 = vst [vmem:[#allocation2 + $0xf0] sm:$0xff] 0.0
    %57 = vst [vmem:[#allocation2 + $0xf8] sm:$0xff] 0.0
    %v58 = vld [vmem:[#allocation2] sm:$0xff]
    %v59 = vld [vmem:[#allocation2 + $0x8] sm:$0x3f]
    %v60 = vld [vmem:[#allocation2 + $0x10] sm:$0xff]
    %v61 = vld [vmem:[#allocation2 + $0x18] sm:$0x3f]
    %v62 = vld [vmem:[#allocation2 + $0x20] sm:$0xff]
    %v63 = vld [vmem:[#allocation2 + $0x28] sm:$0x3f]
    %v64 = vld [vmem:[#allocation2 + $0x30] sm:$0xff]
    %v65 = vld [vmem:[#allocation2 + $0x38] sm:$0x3f]
    %v66 = vld [vmem:[#allocation2 + $0x40] sm:$0xff]
    %v67 = vld [vmem:[#allocation2 + $0x48] sm:$0x3f]
    %v68 = vld [vmem:[#allocation2 + $0x50] sm:$0xff]
    %v69 = vld [vmem:[#allocation2 + $0x58] sm:$0x3f]
    %v70 = vld [vmem:[#allocation2 + $0x60] sm:$0xff]
    %v71 = vld [vmem:[#allocation2 + $0x68] sm:$0x3f]
    %v72 = vld [vmem:[#allocation2 + $0x70] sm:$0xff]
    %v73 = vld [vmem:[#allocation2 + $0x78] sm:$0x3f]
    %v74 = vld [vmem:[#allocation2 + $0x80] sm:$0xff]
    %v75 = vld [vmem:[#allocation2 + $0x88] sm:$0x3f]
    %v76 = vld [vmem:[#allocation2 + $0x90] sm:$0xff]
    %v77 = vld [vmem:[#allocation2 + $0x98] sm:$0x3f]
    %v78 = vld [vmem:[#allocation2 + $0xa0] sm:$0xff]
    %v79 = vld [vmem:[#allocation2 + $0xa8] sm:$0x3f]
    %v80 = vld [vmem:[#allocation2 + $0xb0] sm:$0xff]
    %v81 = vld [vmem:[#allocation2 + $0xb8] sm:$0x3f]
    %v82 = vld [vmem:[#allocation2 + $0xc0] sm:$0xff]
    %v83 = vld [vmem:[#allocation2 + $0xc8] sm:$0x3f]
    %v84 = vld [vmem:[#allocation2 + $0xd0] sm:$0xff]
    %v85 = vld [vmem:[#allocation2 + $0xd8] sm:$0x3f]
    %v86 = vld [vmem:[#allocation3] sm:$0xff]
    %v87 = vld [vmem:[#allocation3 + $0x8] sm:$0x3f]
    %v88 = vld [vmem:[#allocation3 + $0x10] sm:$0xff]
    %v89 = vld [vmem:[#allocation3 + $0x18] sm:$0x3f]
    %v90 = vld [vmem:[#allocation3 + $0x20] sm:$0xff]
    %v91 = vld [vmem:[#allocation3 + $0x28] sm:$0x3f]
    %v92 = vld [vmem:[#allocation3 + $0x30] sm:$0xff]
    %v93 = vld [vmem:[#allocation3 + $0x38] sm:$0x3f]
    %v94 = vld [vmem:[#allocation3 + $0x40] sm:$0xff]
    %v95 = vld [vmem:[#allocation3 + $0x48] sm:$0x3f]
    %v96 = vld [vmem:[#allocation3 + $0x50] sm:$0xff]
    %v97 = vld [vmem:[#allocation3 + $0x58] sm:$0x3f]
    %v98 = vld [vmem:[#allocation3 + $0x60] sm:$0xff]
    %v99 = vld [vmem:[#allocation3 + $0x68] sm:$0x3f]
    %v100 = vld [vmem:[#allocation3 + $0x70] sm:$0xff]
    %v101 = vld [vmem:[#allocation3 + $0x78] sm:$0x3f]
    %v102 = vld [vmem:[#allocation3 + $0x80] sm:$0xff]
    %v103 = vld [vmem:[#allocation3 + $0x88] sm:$0x3f]
    %v104 = vld [vmem:[#allocation3 + $0x90] sm:$0xff]
    %v105 = vld [vmem:[#allocation3 + $0x98] sm:$0x3f]
    %v106 = vld [vmem:[#allocation3 + $0xa0] sm:$0xff]
    %v107 = vld [vmem:[#allocation3 + $0xa8] sm:$0x3f]
    %v108 = vld [vmem:[#allocation3 + $0xb0] sm:$0xff]
    %v109 = vld [vmem:[#allocation3 + $0xb8] sm:$0x3f]
    %v110 = vld [vmem:[#allocation3 + $0xc0] sm:$0xff]
    %v111 = vld [vmem:[#allocation3 + $0xc8] sm:$0x3f]
    %v112 = vld [vmem:[#allocation3 + $0xd0] sm:$0xff]
    %v113 = vld [vmem:[#allocation3 + $0xd8] sm:$0x3f]
    %v114 = vadd.f32 %v58, %v86
    %v115 = vadd.f32 %v59, %v87
    %v116 = vadd.f32 %v60, %v88
    %v117 = vadd.f32 %v61, %v89
    %v118 = vadd.f32 %v62, %v90
    %v119 = vadd.f32 %v63, %v91
    %v120 = vadd.f32 %v64, %v92
    %v121 = vadd.f32 %v65, %v93
    %v122 = vadd.f32 %v66, %v94
    %v123 = vadd.f32 %v67, %v95
    %v124 = vadd.f32 %v68, %v96
    %v125 = vadd.f32 %v69, %v97
    %v126 = vadd.f32 %v70, %v98
    %v127 = vadd.f32 %v71, %v99
    %v128 = vadd.f32 %v72, %v100
    %v129 = vadd.f32 %v73, %v101
    %v130 = vadd.f32 %v74, %v102
    %v131 = vadd.f32 %v75, %v103
    %v132 = vadd.f32 %v76, %v104
    %v133 = vadd.f32 %v77, %v105
    %v134 = vadd.f32 %v78, %v106
    %v135 = vadd.f32 %v79, %v107
    %v136 = vadd.f32 %v80, %v108
    %v137 = vadd.f32 %v81, %v109
    %v138 = vadd.f32 %v82, %v110
    %v139 = vadd.f32 %v83, %v111
    %v140 = vadd.f32 %v84, %v112
    %v141 = vadd.f32 %v85, %v113
    %142 = vst [vmem:[#allocation2] sm:$0xff] %v114
    %143 = vst [vmem:[#allocation2 + $0x8] sm:$0x3f] %v115
    %144 = vst [vmem:[#allocation2 + $0x10] sm:$0xff] %v116
    %145 = vst [vmem:[#allocation2 + $0x18] sm:$0x3f] %v117
    %146 = vst [vmem:[#allocation2 + $0x20] sm:$0xff] %v118
    %147 = vst [vmem:[#allocation2 + $0x28] sm:$0x3f] %v119
    %148 = vst [vmem:[#allocation2 + $0x30] sm:$0xff] %v120
    %149 = vst [vmem:[#allocation2 + $0x38] sm:$0x3f] %v121
    %150 = vst [vmem:[#allocation2 + $0x40] sm:$0xff] %v122
    %151 = vst [vmem:[#allocation2 + $0x48] sm:$0x3f] %v123
    %152 = vst [vmem:[#allocation2 + $0x50] sm:$0xff] %v124
    %153 = vst [vmem:[#allocation2 + $0x58] sm:$0x3f] %v125
    %154 = vst [vmem:[#allocation2 + $0x60] sm:$0xff] %v126
    %155 = vst [vmem:[#allocation2 + $0x68] sm:$0x3f] %v127
    %156 = vst [vmem:[#allocation2 + $0x70] sm:$0xff] %v128
    %157 = vst [vmem:[#allocation2 + $0x78] sm:$0x3f] %v129
    %158 = vst [vmem:[#allocation2 + $0x80] sm:$0xff] %v130
    %159 = vst [vmem:[#allocation2 + $0x88] sm:$0x3f] %v131
    %160 = vst [vmem:[#allocation2 + $0x90] sm:$0xff] %v132
    %161 = vst [vmem:[#allocation2 + $0x98] sm:$0x3f] %v133
    %162 = vst [vmem:[#allocation2 + $0xa0] sm:$0xff] %v134
    %163 = vst [vmem:[#allocation2 + $0xa8] sm:$0x3f] %v135
    %164 = vst [vmem:[#allocation2 + $0xb0] sm:$0xff] %v136
    %165 = vst [vmem:[#allocation2 + $0xb8] sm:$0x3f] %v137
    %166 = vst [vmem:[#allocation2 + $0xc0] sm:$0xff] %v138
    %167 = vst [vmem:[#allocation2 + $0xc8] sm:$0x3f] %v139
    %168 = vst [vmem:[#allocation2 + $0xd0] sm:$0xff] %v140
    %169 = vst [vmem:[#allocation2 + $0xd8] sm:$0x3f] %v141
    %v170 = vld [vmem:[#allocation2 + $0x1] sm:$0xff]
    %v171 = vld [vmem:[#allocation2 + $0x9] sm:$0x3f]
    %v172 = vld [vmem:[#allocation2 + $0x11] sm:$0xff]
    %v173 = vld [vmem:[#allocation2 + $0x19] sm:$0x3f]
    %v174 = vld [vmem:[#allocation2 + $0x21] sm:$0xff]
    %v175 = vld [vmem:[#allocation2 + $0x29] sm:$0x3f]
    %v176 = vld [vmem:[#allocation2 + $0x31] sm:$0xff]
    %v177 = vld [vmem:[#allocation2 + $0x39] sm:$0x3f]
    %v178 = vld [vmem:[#allocation2 + $0x41] sm:$0xff]
    %v179 = vld [vmem:[#allocation2 + $0x49] sm:$0x3f]
    %v180 = vld [vmem:[#allocation2 + $0x51] sm:$0xff]
    %v181 = vld [vmem:[#allocation2 + $0x59] sm:$0x3f]
    %v182 = vld [vmem:[#allocation2 + $0x61] sm:$0xff]
    %v183 = vld [vmem:[#allocation2 + $0x69] sm:$0x3f]
    %v184 = vld [vmem:[#allocation2 + $0x71] sm:$0xff]
    %v185 = vld [vmem:[#allocation2 + $0x79] sm:$0x3f]
    %v186 = vld [vmem:[#allocation2 + $0x81] sm:$0xff]
    %v187 = vld [vmem:[#allocation2 + $0x89] sm:$0x3f]
    %v188 = vld [vmem:[#allocation2 + $0x91] sm:$0xff]
    %v189 = vld [vmem:[#allocation2 + $0x99] sm:$0x3f]
    %v190 = vld [vmem:[#allocation2 + $0xa1] sm:$0xff]
    %v191 = vld [vmem:[#allocation2 + $0xa9] sm:$0x3f]
    %v192 = vld [vmem:[#allocation2 + $0xb1] sm:$0xff]
    %v193 = vld [vmem:[#allocation2 + $0xb9] sm:$0x3f]
    %v194 = vld [vmem:[#allocation2 + $0xc1] sm:$0xff]
    %v195 = vld [vmem:[#allocation2 + $0xc9] sm:$0x3f]
    %v196 = vld [vmem:[#allocation2 + $0xd1] sm:$0xff]
    %v197 = vld [vmem:[#allocation2 + $0xd9] sm:$0x3f]
    %s198 = scalar_lea.vmem [#allocation3], 224
    %v199 = vld [vmem:[%s198] sm:$0xff]
    %v200 = vld [vmem:[%s198 + $0x8] sm:$0x3f]
    %v201 = vld [vmem:[%s198 + $0x10] sm:$0xff]
    %v202 = vld [vmem:[%s198 + $0x18] sm:$0x3f]
    %v203 = vld [vmem:[%s198 + $0x20] sm:$0xff]
    %v204 = vld [vmem:[%s198 + $0x28] sm:$0x3f]
    %v205 = vld [vmem:[%s198 + $0x30] sm:$0xff]
    %v206 = vld [vmem:[%s198 + $0x38] sm:$0x3f]
    %v207 = vld [vmem:[%s198 + $0x40] sm:$0xff]
    %v208 = vld [vmem:[%s198 + $0x48] sm:$0x3f]
    %v209 = vld [vmem:[%s198 + $0x50] sm:$0xff]
    %v210 = vld [vmem:[%s198 + $0x58] sm:$0x3f]
    %v211 = vld [vmem:[%s198 + $0x60] sm:$0xff]
    %v212 = vld [vmem:[%s198 + $0x68] sm:$0x3f]
    %v213 = vld [vmem:[%s198 + $0x70] sm:$0xff]
    %v214 = vld [vmem:[%s198 + $0x78] sm:$0x3f]
    %v215 = vld [vmem:[%s198 + $0x80] sm:$0xff]
    %v216 = vld [vmem:[%s198 + $0x88] sm:$0x3f]
    %v217 = vld [vmem:[%s198 + $0x90] sm:$0xff]
    %v218 = vld [vmem:[%s198 + $0x98] sm:$0x3f]
    %v219 = vld [vmem:[%s198 + $0xa0] sm:$0xff]
    %v220 = vld [vmem:[%s198 + $0xa8] sm:$0x3f]
    %v221 = vld [vmem:[%s198 + $0xb0] sm:$0xff]
    %v222 = vld [vmem:[%s198 + $0xb8] sm:$0x3f]
    %v223 = vld [vmem:[%s198 + $0xc0] sm:$0xff]
    %v224 = vld [vmem:[%s198 + $0xc8] sm:$0x3f]
    %v225 = vld [vmem:[%s198 + $0xd0] sm:$0xff]
    %v226 = vld [vmem:[%s198 + $0xd8] sm:$0x3f]
    %v227 = vadd.f32 %v170, %v199
    %v228 = vadd.f32 %v171, %v200
    %v229 = vadd.f32 %v172, %v201
    %v230 = vadd.f32 %v173, %v202
    %v231 = vadd.f32 %v174, %v203
    %v232 = vadd.f32 %v175, %v204
    %v233 = vadd.f32 %v176, %v205
    %v234 = vadd.f32 %v177, %v206
    %v235 = vadd.f32 %v178, %v207
    %v236 = vadd.f32 %v179, %v208
    %v237 = vadd.f32 %v180, %v209
    %v238 = vadd.f32 %v181, %v210
    %v239 = vadd.f32 %v182, %v211
    %v240 = vadd.f32 %v183, %v212
    %v241 = vadd.f32 %v184, %v213
    %v242 = vadd.f32 %v185, %v214
    %v243 = vadd.f32 %v186, %v215
    %v244 = vadd.f32 %v187, %v216
    %v245 = vadd.f32 %v188, %v217
    %v246 = vadd.f32 %v189, %v218
    %v247 = vadd.f32 %v190, %v219
    %v248 = vadd.f32 %v191, %v220
    %v249 = vadd.f32 %v192, %v221
    %v250 = vadd.f32 %v193, %v222
    %v251 = vadd.f32 %v194, %v223
    %v252 = vadd.f32 %v195, %v224
    %v253 = vadd.f32 %v196, %v225
    %v254 = vadd.f32 %v197, %v226
    %255 = vst [vmem:[#allocation2 + $0x1] sm:$0xff] %v227
    %256 = vst [vmem:[#allocation2 + $0x9] sm:$0x3f] %v228
    %257 = vst [vmem:[#allocation2 + $0x11] sm:$0xff] %v229
    %258 = vst [vmem:[#allocation2 + $0x19] sm:$0x3f] %v230
    %259 = vst [vmem:[#allocation2 + $0x21] sm:$0xff] %v231
    %260 = vst [vmem:[#allocation2 + $0x29] sm:$0x3f] %v232
    %261 = vst [vmem:[#allocation2 + $0x31] sm:$0xff] %v233
    %262 = vst [vmem:[#allocation2 + $0x39] sm:$0x3f] %v234
    %263 = vst [vmem:[#allocation2 + $0x41] sm:$0xff] %v235
    %264 = vst [vmem:[#allocation2 + $0x49] sm:$0x3f] %v236
    %265 = vst [vmem:[#allocation2 + $0x51] sm:$0xff] %v237
    %266 = vst [vmem:[#allocation2 + $0x59] sm:$0x3f] %v238
    %267 = vst [vmem:[#allocation2 + $0x61] sm:$0xff] %v239
    %268 = vst [vmem:[#allocation2 + $0x69] sm:$0x3f] %v240
    %269 = vst [vmem:[#allocation2 + $0x71] sm:$0xff] %v241
    %270 = vst [vmem:[#allocation2 + $0x79] sm:$0x3f] %v242
    %271 = vst [vmem:[#allocation2 + $0x81] sm:$0xff] %v243
    %272 = vst [vmem:[#allocation2 + $0x89] sm:$0x3f] %v244
    %273 = vst [vmem:[#allocation2 + $0x91] sm:$0xff] %v245
    %274 = vst [vmem:[#allocation2 + $0x99] sm:$0x3f] %v246
    %275 = vst [vmem:[#allocation2 + $0xa1] sm:$0xff] %v247
    %276 = vst [vmem:[#allocation2 + $0xa9] sm:$0x3f] %v248
    %277 = vst [vmem:[#allocation2 + $0xb1] sm:$0xff] %v249
    %278 = vst [vmem:[#allocation2 + $0xb9] sm:$0x3f] %v250
    %279 = vst [vmem:[#allocation2 + $0xc1] sm:$0xff] %v251
    %280 = vst [vmem:[#allocation2 + $0xc9] sm:$0x3f] %v252
    %281 = vst [vmem:[#allocation2 + $0xd1] sm:$0xff] %v253
    %282 = vst [vmem:[#allocation2 + $0xd9] sm:$0x3f] %v254
    %v283 = vld [vmem:[#allocation2 + $0x2] sm:$0xff]
    %v284 = vld [vmem:[#allocation2 + $0xa] sm:$0x3f]
    %v285 = vld [vmem:[#allocation2 + $0x12] sm:$0xff]
    %v286 = vld [vmem:[#allocation2 + $0x1a] sm:$0x3f]
    %v287 = vld [vmem:[#allocation2 + $0x22] sm:$0xff]
    %v288 = vld [vmem:[#allocation2 + $0x2a] sm:$0x3f]
    %v289 = vld [vmem:[#allocation2 + $0x32] sm:$0xff]
    %v290 = vld [vmem:[#allocation2 + $0x3a] sm:$0x3f]
    %v291 = vld [vmem:[#allocation2 + $0x42] sm:$0xff]
    %v292 = vld [vmem:[#allocation2 + $0x4a] sm:$0x3f]
    %v293 = vld [vmem:[#allocation2 + $0x52] sm:$0xff]
    %v294 = vld [vmem:[#allocation2 + $0x5a] sm:$0x3f]
    %v295 = vld [vmem:[#allocation2 + $0x62] sm:$0xff]
    %v296 = vld [vmem:[#allocation2 + $0x6a] sm:$0x3f]
    %v297 = vld [vmem:[#allocation2 + $0x72] sm:$0xff]
    %v298 = vld [vmem:[#allocation2 + $0x7a] sm:$0x3f]
    %v299 = vld [vmem:[#allocation2 + $0x82] sm:$0xff]
    %v300 = vld [vmem:[#allocation2 + $0x8a] sm:$0x3f]
    %v301 = vld [vmem:[#allocation2 + $0x92] sm:$0xff]
    %v302 = vld [vmem:[#allocation2 + $0x9a] sm:$0x3f]
    %v303 = vld [vmem:[#allocation2 + $0xa2] sm:$0xff]
    %v304 = vld [vmem:[#allocation2 + $0xaa] sm:$0x3f]
    %v305 = vld [vmem:[#allocation2 + $0xb2] sm:$0xff]
    %v306 = vld [vmem:[#allocation2 + $0xba] sm:$0x3f]
    %v307 = vld [vmem:[#allocation2 + $0xc2] sm:$0xff]
    %v308 = vld [vmem:[#allocation2 + $0xca] sm:$0x3f]
    %v309 = vld [vmem:[#allocation2 + $0xd2] sm:$0xff]
    %v310 = vld [vmem:[#allocation2 + $0xda] sm:$0x3f]
    %s311 = scalar_lea.vmem [#allocation3], 448
    %v312 = vld [vmem:[%s311] sm:$0xff]
    %v313 = vld [vmem:[%s311 + $0x8] sm:$0x3f]
    %v314 = vld [vmem:[%s311 + $0x10] sm:$0xff]
    %v315 = vld [vmem:[%s311 + $0x18] sm:$0x3f]
    %v316 = vld [vmem:[%s311 + $0x20] sm:$0xff]
    %v317 = vld [vmem:[%s311 + $0x28] sm:$0x3f]
    %v318 = vld [vmem:[%s311 + $0x30] sm:$0xff]
    %v319 = vld [vmem:[%s311 + $0x38] sm:$0x3f]
    %v320 = vld [vmem:[%s311 + $0x40] sm:$0xff]
    %v321 = vld [vmem:[%s311 + $0x48] sm:$0x3f]
    %v322 = vld [vmem:[%s311 + $0x50] sm:$0xff]
    %v323 = vld [vmem:[%s311 + $0x58] sm:$0x3f]
    %v324 = vld [vmem:[%s311 + $0x60] sm:$0xff]
    %v325 = vld [vmem:[%s311 + $0x68] sm:$0x3f]
    %v326 = vld [vmem:[%s311 + $0x70] sm:$0xff]
    %v327 = vld [vmem:[%s311 + $0x78] sm:$0x3f]
    %v328 = vld [vmem:[%s311 + $0x80] sm:$0xff]
    %v329 = vld [vmem:[%s311 + $0x88] sm:$0x3f]
    %v330 = vld [vmem:[%s311 + $0x90] sm:$0xff]
    %v331 = vld [vmem:[%s311 + $0x98] sm:$0x3f]
    %v332 = vld [vmem:[%s311 + $0xa0] sm:$0xff]
    %v333 = vld [vmem:[%s311 + $0xa8] sm:$0x3f]
    %v334 = vld [vmem:[%s311 + $0xb0] sm:$0xff]
    %v335 = vld [vmem:[%s311 + $0xb8] sm:$0x3f]
    %v336 = vld [vmem:[%s311 + $0xc0] sm:$0xff]
    %v337 = vld [vmem:[%s311 + $0xc8] sm:$0x3f]
    %v338 = vld [vmem:[%s311 + $0xd0] sm:$0xff]
    %v339 = vld [vmem:[%s311 + $0xd8] sm:$0x3f]
    %v340 = vadd.f32 %v283, %v312
    %v341 = vadd.f32 %v284, %v313
    %v342 = vadd.f32 %v285, %v314
    %v343 = vadd.f32 %v286, %v315
    %v344 = vadd.f32 %v287, %v316
    %v345 = vadd.f32 %v288, %v317
    %v346 = vadd.f32 %v289, %v318
    %v347 = vadd.f32 %v290, %v319
    %v348 = vadd.f32 %v291, %v320
    %v349 = vadd.f32 %v292, %v321
    %v350 = vadd.f32 %v293, %v322
    %v351 = vadd.f32 %v294, %v323
    %v352 = vadd.f32 %v295, %v324
    %v353 = vadd.f32 %v296, %v325
    %v354 = vadd.f32 %v297, %v326
    %v355 = vadd.f32 %v298, %v327
    %v356 = vadd.f32 %v299, %v328
    %v357 = vadd.f32 %v300, %v329
    %v358 = vadd.f32 %v301, %v330
    %v359 = vadd.f32 %v302, %v331
    %v360 = vadd.f32 %v303, %v332
    %v361 = vadd.f32 %v304, %v333
    %v362 = vadd.f32 %v305, %v334
    %v363 = vadd.f32 %v306, %v335
    %v364 = vadd.f32 %v307, %v336
    %v365 = vadd.f32 %v308, %v337
    %v366 = vadd.f32 %v309, %v338
    %v367 = vadd.f32 %v310, %v339
    %368 = vst [vmem:[#allocation2 + $0x2] sm:$0xff] %v340
    %369 = vst [vmem:[#allocation2 + $0xa] sm:$0x3f] %v341
    %370 = vst [vmem:[#allocation2 + $0x12] sm:$0xff] %v342
    %371 = vst [vmem:[#allocation2 + $0x1a] sm:$0x3f] %v343
    %372 = vst [vmem:[#allocation2 + $0x22] sm:$0xff] %v344
    %373 = vst [vmem:[#allocation2 + $0x2a] sm:$0x3f] %v345
    %374 = vst [vmem:[#allocation2 + $0x32] sm:$0xff] %v346
    %375 = vst [vmem:[#allocation2 + $0x3a] sm:$0x3f] %v347
    %376 = vst [vmem:[#allocation2 + $0x42] sm:$0xff] %v348
    %377 = vst [vmem:[#allocation2 + $0x4a] sm:$0x3f] %v349
    %378 = vst [vmem:[#allocation2 + $0x52] sm:$0xff] %v350
    %379 = vst [vmem:[#allocation2 + $0x5a] sm:$0x3f] %v351
    %380 = vst [vmem:[#allocation2 + $0x62] sm:$0xff] %v352
    %381 = vst [vmem:[#allocation2 + $0x6a] sm:$0x3f] %v353
    %382 = vst [vmem:[#allocation2 + $0x72] sm:$0xff] %v354
    %383 = vst [vmem:[#allocation2 + $0x7a] sm:$0x3f] %v355
    %384 = vst [vmem:[#allocation2 + $0x82] sm:$0xff] %v356
    %385 = vst [vmem:[#allocation2 + $0x8a] sm:$0x3f] %v357
    %386 = vst [vmem:[#allocation2 + $0x92] sm:$0xff] %v358
    %387 = vst [vmem:[#allocation2 + $0x9a] sm:$0x3f] %v359
    %388 = vst [vmem:[#allocation2 + $0xa2] sm:$0xff] %v360
    %389 = vst [vmem:[#allocation2 + $0xaa] sm:$0x3f] %v361
    %390 = vst [vmem:[#allocation2 + $0xb2] sm:$0xff] %v362
    %391 = vst [vmem:[#allocation2 + $0xba] sm:$0x3f] %v363
    %392 = vst [vmem:[#allocation2 + $0xc2] sm:$0xff] %v364
    %393 = vst [vmem:[#allocation2 + $0xca] sm:$0x3f] %v365
    %394 = vst [vmem:[#allocation2 + $0xd2] sm:$0xff] %v366
    %395 = vst [vmem:[#allocation2 + $0xda] sm:$0x3f] %v367
    %s396 = scalar_lea.vmem [#allocation2], 16
    %v397 = vld [vmem:[%s396] sm:$0xff]
    %v398 = vld [vmem:[%s396 + $0x8] sm:$0x3f]
    %v399 = vld [vmem:[%s396 + $0x10] sm:$0xff]
    %v400 = vld [vmem:[%s396 + $0x18] sm:$0x3f]
    %v401 = vld [vmem:[%s396 + $0x20] sm:$0xff]
    %v402 = vld [vmem:[%s396 + $0x28] sm:$0x3f]
    %v403 = vld [vmem:[%s396 + $0x30] sm:$0xff]
    %v404 = vld [vmem:[%s396 + $0x38] sm:$0x3f]
    %v405 = vld [vmem:[%s396 + $0x40] sm:$0xff]
    %v406 = vld [vmem:[%s396 + $0x48] sm:$0x3f]
    %v407 = vld [vmem:[%s396 + $0x50] sm:$0xff]
    %v408 = vld [vmem:[%s396 + $0x58] sm:$0x3f]
    %v409 = vld [vmem:[%s396 + $0x60] sm:$0xff]
    %v410 = vld [vmem:[%s396 + $0x68] sm:$0x3f]
    %v411 = vld [vmem:[%s396 + $0x70] sm:$0xff]
    %v412 = vld [vmem:[%s396 + $0x78] sm:$0x3f]
    %v413 = vld [vmem:[%s396 + $0x80] sm:$0xff]
    %v414 = vld [vmem:[%s396 + $0x88] sm:$0x3f]
    %v415 = vld [vmem:[%s396 + $0x90] sm:$0xff]
    %v416 = vld [vmem:[%s396 + $0x98] sm:$0x3f]
    %v417 = vld [vmem:[%s396 + $0xa0] sm:$0xff]
    %v418 = vld [vmem:[%s396 + $0xa8] sm:$0x3f]
    %v419 = vld [vmem:[%s396 + $0xb0] sm:$0xff]
    %v420 = vld [vmem:[%s396 + $0xb8] sm:$0x3f]
    %v421 = vld [vmem:[%s396 + $0xc0] sm:$0xff]
    %v422 = vld [vmem:[%s396 + $0xc8] sm:$0x3f]
    %v423 = vld [vmem:[%s396 + $0xd0] sm:$0xff]
    %v424 = vld [vmem:[%s396 + $0xd8] sm:$0x3f]
    %s425 = scalar_lea.vmem [#allocation3], 672
    %v426 = vld [vmem:[%s425] sm:$0xff]
    %v427 = vld [vmem:[%s425 + $0x8] sm:$0x3f]
    %v428 = vld [vmem:[%s425 + $0x10] sm:$0xff]
    %v429 = vld [vmem:[%s425 + $0x18] sm:$0x3f]
    %v430 = vld [vmem:[%s425 + $0x20] sm:$0xff]
    %v431 = vld [vmem:[%s425 + $0x28] sm:$0x3f]
    %v432 = vld [vmem:[%s425 + $0x30] sm:$0xff]
    %v433 = vld [vmem:[%s425 + $0x38] sm:$0x3f]
    %v434 = vld [vmem:[%s425 + $0x40] sm:$0xff]
    %v435 = vld [vmem:[%s425 + $0x48] sm:$0x3f]
    %v436 = vld [vmem:[%s425 + $0x50] sm:$0xff]
    %v437 = vld [vmem:[%s425 + $0x58] sm:$0x3f]
    %v438 = vld [vmem:[%s425 + $0x60] sm:$0xff]
    %v439 = vld [vmem:[%s425 + $0x68] sm:$0x3f]
    %v440 = vld [vmem:[%s425 + $0x70] sm:$0xff]
    %v441 = vld [vmem:[%s425 + $0x78] sm:$0x3f]
    %v442 = vld [vmem:[%s425 + $0x80] sm:$0xff]
    %v443 = vld [vmem:[%s425 + $0x88] sm:$0x3f]
    %v444 = vld [vmem:[%s425 + $0x90] sm:$0xff]
    %v445 = vld [vmem:[%s425 + $0x98] sm:$0x3f]
    %v446 = vld [vmem:[%s425 + $0xa0] sm:$0xff]
    %v447 = vld [vmem:[%s425 + $0xa8] sm:$0x3f]
    %v448 = vld [vmem:[%s425 + $0xb0] sm:$0xff]
    %v449 = vld [vmem:[%s425 + $0xb8] sm:$0x3f]
    %v450 = vld [vmem:[%s425 + $0xc0] sm:$0xff]
    %v451 = vld [vmem:[%s425 + $0xc8] sm:$0x3f]
    %v452 = vld [vmem:[%s425 + $0xd0] sm:$0xff]
    %v453 = vld [vmem:[%s425 + $0xd8] sm:$0x3f]
    %v454 = vadd.f32 %v397, %v426
    %v455 = vadd.f32 %v398, %v427
    %v456 = vadd.f32 %v399, %v428
    %v457 = vadd.f32 %v400, %v429
    %v458 = vadd.f32 %v401, %v430
    %v459 = vadd.f32 %v402, %v431
    %v460 = vadd.f32 %v403, %v432
    %v461 = vadd.f32 %v404, %v433
    %v462 = vadd.f32 %v405, %v434
    %v463 = vadd.f32 %v406, %v435
    %v464 = vadd.f32 %v407, %v436
    %v465 = vadd.f32 %v408, %v437
    %v466 = vadd.f32 %v409, %v438
    %v467 = vadd.f32 %v410, %v439
    %v468 = vadd.f32 %v411, %v440
    %v469 = vadd.f32 %v412, %v441
    %v470 = vadd.f32 %v413, %v442
    %v471 = vadd.f32 %v414, %v443
    %v472 = vadd.f32 %v415, %v444
    %v473 = vadd.f32 %v416, %v445
    %v474 = vadd.f32 %v417, %v446
    %v475 = vadd.f32 %v418, %v447
    %v476 = vadd.f32 %v419, %v448
    %v477 = vadd.f32 %v420, %v449
    %v478 = vadd.f32 %v421, %v450
    %v479 = vadd.f32 %v422, %v451
    %v480 = vadd.f32 %v423, %v452
    %v481 = vadd.f32 %v424, %v453
    %482 = vst [vmem:[%s396] sm:$0xff] %v454
    %483 = vst [vmem:[%s396 + $0x8] sm:$0x3f] %v455
    %484 = vst [vmem:[%s396 + $0x10] sm:$0xff] %v456
    %485 = vst [vmem:[%s396 + $0x18] sm:$0x3f] %v457
    %486 = vst [vmem:[%s396 + $0x20] sm:$0xff] %v458
    %487 = vst [vmem:[%s396 + $0x28] sm:$0x3f] %v459
    %488 = vst [vmem:[%s396 + $0x30] sm:$0xff] %v460
    %489 = vst [vmem:[%s396 + $0x38] sm:$0x3f] %v461
    %490 = vst [vmem:[%s396 + $0x40] sm:$0xff] %v462
    %491 = vst [vmem:[%s396 + $0x48] sm:$0x3f] %v463
    %492 = vst [vmem:[%s396 + $0x50] sm:$0xff] %v464
    %493 = vst [vmem:[%s396 + $0x58] sm:$0x3f] %v465
    %494 = vst [vmem:[%s396 + $0x60] sm:$0xff] %v466
    %495 = vst [vmem:[%s396 + $0x68] sm:$0x3f] %v467
    %496 = vst [vmem:[%s396 + $0x70] sm:$0xff] %v468
    %497 = vst [vmem:[%s396 + $0x78] sm:$0x3f] %v469
    %498 = vst [vmem:[%s396 + $0x80] sm:$0xff] %v470
    %499 = vst [vmem:[%s396 + $0x88] sm:$0x3f] %v471
    %500 = vst [vmem:[%s396 + $0x90] sm:$0xff] %v472
    %501 = vst [vmem:[%s396 + $0x98] sm:$0x3f] %v473
    %502 = vst [vmem:[%s396 + $0xa0] sm:$0xff] %v474
    %503 = vst [vmem:[%s396 + $0xa8] sm:$0x3f] %v475
    %504 = vst [vmem:[%s396 + $0xb0] sm:$0xff] %v476
    %505 = vst [vmem:[%s396 + $0xb8] sm:$0x3f] %v477
    %506 = vst [vmem:[%s396 + $0xc0] sm:$0xff] %v478
    %507 = vst [vmem:[%s396 + $0xc8] sm:$0x3f] %v479
    %508 = vst [vmem:[%s396 + $0xd0] sm:$0xff] %v480
    %509 = vst [vmem:[%s396 + $0xd8] sm:$0x3f] %v481
    %v510 = vld [vmem:[%s396 + $0x1] sm:$0xff]
    %v511 = vld [vmem:[%s396 + $0x9] sm:$0x3f]
    %v512 = vld [vmem:[%s396 + $0x11] sm:$0xff]
    %v513 = vld [vmem:[%s396 + $0x19] sm:$0x3f]
    %v514 = vld [vmem:[%s396 + $0x21] sm:$0xff]
    %v515 = vld [vmem:[%s396 + $0x29] sm:$0x3f]
    %v516 = vld [vmem:[%s396 + $0x31] sm:$0xff]
    %v517 = vld [vmem:[%s396 + $0x39] sm:$0x3f]
    %v518 = vld [vmem:[%s396 + $0x41] sm:$0xff]
    %v519 = vld [vmem:[%s396 + $0x49] sm:$0x3f]
    %v520 = vld [vmem:[%s396 + $0x51] sm:$0xff]
    %v521 = vld [vmem:[%s396 + $0x59] sm:$0x3f]
    %v522 = vld [vmem:[%s396 + $0x61] sm:$0xff]
    %v523 = vld [vmem:[%s396 + $0x69] sm:$0x3f]
    %v524 = vld [vmem:[%s396 + $0x71] sm:$0xff]
    %v525 = vld [vmem:[%s396 + $0x79] sm:$0x3f]
    %v526 = vld [vmem:[%s396 + $0x81] sm:$0xff]
    %v527 = vld [vmem:[%s396 + $0x89] sm:$0x3f]
    %v528 = vld [vmem:[%s396 + $0x91] sm:$0xff]
    %v529 = vld [vmem:[%s396 + $0x99] sm:$0x3f]
    %v530 = vld [vmem:[%s396 + $0xa1] sm:$0xff]
    %v531 = vld [vmem:[%s396 + $0xa9] sm:$0x3f]
    %v532 = vld [vmem:[%s396 + $0xb1] sm:$0xff]
    %v533 = vld [vmem:[%s396 + $0xb9] sm:$0x3f]
    %v534 = vld [vmem:[%s396 + $0xc1] sm:$0xff]
    %v535 = vld [vmem:[%s396 + $0xc9] sm:$0x3f]
    %v536 = vld [vmem:[%s396 + $0xd1] sm:$0xff]
    %v537 = vld [vmem:[%s396 + $0xd9] sm:$0x3f]
    %s538 = scalar_lea.vmem [#allocation3], 896
    %v539 = vld [vmem:[%s538] sm:$0xff]
    %v540 = vld [vmem:[%s538 + $0x8] sm:$0x3f]
    %v541 = vld [vmem:[%s538 + $0x10] sm:$0xff]
    %v542 = vld [vmem:[%s538 + $0x18] sm:$0x3f]
    %v543 = vld [vmem:[%s538 + $0x20] sm:$0xff]
    %v544 = vld [vmem:[%s538 + $0x28] sm:$0x3f]
    %v545 = vld [vmem:[%s538 + $0x30] sm:$0xff]
    %v546 = vld [vmem:[%s538 + $0x38] sm:$0x3f]
    %v547 = vld [vmem:[%s538 + $0x40] sm:$0xff]
    %v548 = vld [vmem:[%s538 + $0x48] sm:$0x3f]
    %v549 = vld [vmem:[%s538 + $0x50] sm:$0xff]
    %v550 = vld [vmem:[%s538 + $0x58] sm:$0x3f]
    %v551 = vld [vmem:[%s538 + $0x60] sm:$0xff]
    %v552 = vld [vmem:[%s538 + $0x68] sm:$0x3f]
    %v553 = vld [vmem:[%s538 + $0x70] sm:$0xff]
    %v554 = vld [vmem:[%s538 + $0x78] sm:$0x3f]
    %v555 = vld [vmem:[%s538 + $0x80] sm:$0xff]
    %v556 = vld [vmem:[%s538 + $0x88] sm:$0x3f]
    %v557 = vld [vmem:[%s538 + $0x90] sm:$0xff]
    %v558 = vld [vmem:[%s538 + $0x98] sm:$0x3f]
    %v559 = vld [vmem:[%s538 + $0xa0] sm:$0xff]
    %v560 = vld [vmem:[%s538 + $0xa8] sm:$0x3f]
    %v561 = vld [vmem:[%s538 + $0xb0] sm:$0xff]
    %v562 = vld [vmem:[%s538 + $0xb8] sm:$0x3f]
    %v563 = vld [vmem:[%s538 + $0xc0] sm:$0xff]
    %v564 = vld [vmem:[%s538 + $0xc8] sm:$0x3f]
    %v565 = vld [vmem:[%s538 + $0xd0] sm:$0xff]
    %v566 = vld [vmem:[%s538 + $0xd8] sm:$0x3f]
    %v567 = vadd.f32 %v510, %v539
    %v568 = vadd.f32 %v511, %v540
    %v569 = vadd.f32 %v512, %v541
    %v570 = vadd.f32 %v513, %v542
    %v571 = vadd.f32 %v514, %v543
    %v572 = vadd.f32 %v515, %v544
    %v573 = vadd.f32 %v516, %v545
    %v574 = vadd.f32 %v517, %v546
    %v575 = vadd.f32 %v518, %v547
    %v576 = vadd.f32 %v519, %v548
    %v577 = vadd.f32 %v520, %v549
    %v578 = vadd.f32 %v521, %v550
    %v579 = vadd.f32 %v522, %v551
    %v580 = vadd.f32 %v523, %v552
    %v581 = vadd.f32 %v524, %v553
    %v582 = vadd.f32 %v525, %v554
    %v583 = vadd.f32 %v526, %v555
    %v584 = vadd.f32 %v527, %v556
    %v585 = vadd.f32 %v528, %v557
    %v586 = vadd.f32 %v529, %v558
    %v587 = vadd.f32 %v530, %v559
    %v588 = vadd.f32 %v531, %v560
    %v589 = vadd.f32 %v532, %v561
    %v590 = vadd.f32 %v533, %v562
    %v591 = vadd.f32 %v534, %v563
    %v592 = vadd.f32 %v535, %v564
    %v593 = vadd.f32 %v536, %v565
    %v594 = vadd.f32 %v537, %v566
    %595 = vst [vmem:[%s396 + $0x1] sm:$0xff] %v567
    %596 = vst [vmem:[%s396 + $0x9] sm:$0x3f] %v568
    %597 = vst [vmem:[%s396 + $0x11] sm:$0xff] %v569
    %598 = vst [vmem:[%s396 + $0x19] sm:$0x3f] %v570
    %599 = vst [vmem:[%s396 + $0x21] sm:$0xff] %v571
    %600 = vst [vmem:[%s396 + $0x29] sm:$0x3f] %v572
    %601 = vst [vmem:[%s396 + $0x31] sm:$0xff] %v573
    %602 = vst [vmem:[%s396 + $0x39] sm:$0x3f] %v574
    %603 = vst [vmem:[%s396 + $0x41] sm:$0xff] %v575
    %604 = vst [vmem:[%s396 + $0x49] sm:$0x3f] %v576
    %605 = vst [vmem:[%s396 + $0x51] sm:$0xff] %v577
    %606 = vst [vmem:[%s396 + $0x59] sm:$0x3f] %v578
    %607 = vst [vmem:[%s396 + $0x61] sm:$0xff] %v579
    %608 = vst [vmem:[%s396 + $0x69] sm:$0x3f] %v580
    %609 = vst [vmem:[%s396 + $0x71] sm:$0xff] %v581
    %610 = vst [vmem:[%s396 + $0x79] sm:$0x3f] %v582
    %611 = vst [vmem:[%s396 + $0x81] sm:$0xff] %v583
    %612 = vst [vmem:[%s396 + $0x89] sm:$0x3f] %v584
    %613 = vst [vmem:[%s396 + $0x91] sm:$0xff] %v585
    %614 = vst [vmem:[%s396 + $0x99] sm:$0x3f] %v586
    %615 = vst [vmem:[%s396 + $0xa1] sm:$0xff] %v587
    %616 = vst [vmem:[%s396 + $0xa9] sm:$0x3f] %v588
    %617 = vst [vmem:[%s396 + $0xb1] sm:$0xff] %v589
    %618 = vst [vmem:[%s396 + $0xb9] sm:$0x3f] %v590
    %619 = vst [vmem:[%s396 + $0xc1] sm:$0xff] %v591
    %620 = vst [vmem:[%s396 + $0xc9] sm:$0x3f] %v592
    %621 = vst [vmem:[%s396 + $0xd1] sm:$0xff] %v593
    %622 = vst [vmem:[%s396 + $0xd9] sm:$0x3f] %v594
    %v623 = vld [vmem:[%s396 + $0x2] sm:$0xff]
    %v624 = vld [vmem:[%s396 + $0xa] sm:$0x3f]
    %v625 = vld [vmem:[%s396 + $0x12] sm:$0xff]
    %v626 = vld [vmem:[%s396 + $0x1a] sm:$0x3f]
    %v627 = vld [vmem:[%s396 + $0x22] sm:$0xff]
    %v628 = vld [vmem:[%s396 + $0x2a] sm:$0x3f]
    %v629 = vld [vmem:[%s396 + $0x32] sm:$0xff]
    %v630 = vld [vmem:[%s396 + $0x3a] sm:$0x3f]
    %v631 = vld [vmem:[%s396 + $0x42] sm:$0xff]
    %v632 = vld [vmem:[%s396 + $0x4a] sm:$0x3f]
    %v633 = vld [vmem:[%s396 + $0x52] sm:$0xff]
    %v634 = vld [vmem:[%s396 + $0x5a] sm:$0x3f]
    %v635 = vld [vmem:[%s396 + $0x62] sm:$0xff]
    %v636 = vld [vmem:[%s396 + $0x6a] sm:$0x3f]
    %v637 = vld [vmem:[%s396 + $0x72] sm:$0xff]
    %v638 = vld [vmem:[%s396 + $0x7a] sm:$0x3f]
    %v639 = vld [vmem:[%s396 + $0x82] sm:$0xff]
    %v640 = vld [vmem:[%s396 + $0x8a] sm:$0x3f]
    %v641 = vld [vmem:[%s396 + $0x92] sm:$0xff]
    %v642 = vld [vmem:[%s396 + $0x9a] sm:$0x3f]
    %v643 = vld [vmem:[%s396 + $0xa2] sm:$0xff]
    %v644 = vld [vmem:[%s396 + $0xaa] sm:$0x3f]
    %v645 = vld [vmem:[%s396 + $0xb2] sm:$0xff]
    %v646 = vld [vmem:[%s396 + $0xba] sm:$0x3f]
    %v647 = vld [vmem:[%s396 + $0xc2] sm:$0xff]
    %v648 = vld [vmem:[%s396 + $0xca] sm:$0x3f]
    %v649 = vld [vmem:[%s396 + $0xd2] sm:$0xff]
    %v650 = vld [vmem:[%s396 + $0xda] sm:$0x3f]
    %s651 = scalar_lea.vmem [#allocation3], 1120
    %v652 = vld [vmem:[%s651] sm:$0xff]
    %v653 = vld [vmem:[%s651 + $0x8] sm:$0x3f]
    %v654 = vld [vmem:[%s651 + $0x10] sm:$0xff]
    %v655 = vld [vmem:[%s651 + $0x18] sm:$0x3f]
    %v656 = vld [vmem:[%s651 + $0x20] sm:$0xff]
    %v657 = vld [vmem:[%s651 + $0x28] sm:$0x3f]
    %v658 = vld [vmem:[%s651 + $0x30] sm:$0xff]
    %v659 = vld [vmem:[%s651 + $0x38] sm:$0x3f]
    %v660 = vld [vmem:[%s651 + $0x40] sm:$0xff]
    %v661 = vld [vmem:[%s651 + $0x48] sm:$0x3f]
    %v662 = vld [vmem:[%s651 + $0x50] sm:$0xff]
    %v663 = vld [vmem:[%s651 + $0x58] sm:$0x3f]
    %v664 = vld [vmem:[%s651 + $0x60] sm:$0xff]
    %v665 = vld [vmem:[%s651 + $0x68] sm:$0x3f]
    %v666 = vld [vmem:[%s651 + $0x70] sm:$0xff]
    %v667 = vld [vmem:[%s651 + $0x78] sm:$0x3f]
    %v668 = vld [vmem:[%s651 + $0x80] sm:$0xff]
    %v669 = vld [vmem:[%s651 + $0x88] sm:$0x3f]
    %v670 = vld [vmem:[%s651 + $0x90] sm:$0xff]
    %v671 = vld [vmem:[%s651 + $0x98] sm:$0x3f]
    %v672 = vld [vmem:[%s651 + $0xa0] sm:$0xff]
    %v673 = vld [vmem:[%s651 + $0xa8] sm:$0x3f]
    %v674 = vld [vmem:[%s651 + $0xb0] sm:$0xff]
    %v675 = vld [vmem:[%s651 + $0xb8] sm:$0x3f]
    %v676 = vld [vmem:[%s651 + $0xc0] sm:$0xff]
    %v677 = vld [vmem:[%s651 + $0xc8] sm:$0x3f]
    %v678 = vld [vmem:[%s651 + $0xd0] sm:$0xff]
    %v679 = vld [vmem:[%s651 + $0xd8] sm:$0x3f]
    %v680 = vadd.f32 %v623, %v652
    %v681 = vadd.f32 %v624, %v653
    %v682 = vadd.f32 %v625, %v654
    %v683 = vadd.f32 %v626, %v655
    %v684 = vadd.f32 %v627, %v656
    %v685 = vadd.f32 %v628, %v657
    %v686 = vadd.f32 %v629, %v658
    %v687 = vadd.f32 %v630, %v659
    %v688 = vadd.f32 %v631, %v660
    %v689 = vadd.f32 %v632, %v661
    %v690 = vadd.f32 %v633, %v662
    %v691 = vadd.f32 %v634, %v663
    %v692 = vadd.f32 %v635, %v664
    %v693 = vadd.f32 %v636, %v665
    %v694 = vadd.f32 %v637, %v666
    %v695 = vadd.f32 %v638, %v667
    %v696 = vadd.f32 %v639, %v668
    %v697 = vadd.f32 %v640, %v669
    %v698 = vadd.f32 %v641, %v670
    %v699 = vadd.f32 %v642, %v671
    %v700 = vadd.f32 %v643, %v672
    %v701 = vadd.f32 %v644, %v673
    %v702 = vadd.f32 %v645, %v674
    %v703 = vadd.f32 %v646, %v675
    %v704 = vadd.f32 %v647, %v676
    %v705 = vadd.f32 %v648, %v677
    %v706 = vadd.f32 %v649, %v678
    %v707 = vadd.f32 %v650, %v679
    %708 = vst [vmem:[%s396 + $0x2] sm:$0xff] %v680
    %709 = vst [vmem:[%s396 + $0xa] sm:$0x3f] %v681
    %710 = vst [vmem:[%s396 + $0x12] sm:$0xff] %v682
    %711 = vst [vmem:[%s396 + $0x1a] sm:$0x3f] %v683
    %712 = vst [vmem:[%s396 + $0x22] sm:$0xff] %v684
    %713 = vst [vmem:[%s396 + $0x2a] sm:$0x3f] %v685
    %714 = vst [vmem:[%s396 + $0x32] sm:$0xff] %v686
    %715 = vst [vmem:[%s396 + $0x3a] sm:$0x3f] %v687
    %716 = vst [vmem:[%s396 + $0x42] sm:$0xff] %v688
    %717 = vst [vmem:[%s396 + $0x4a] sm:$0x3f] %v689
    %718 = vst [vmem:[%s396 + $0x52] sm:$0xff] %v690
    %719 = vst [vmem:[%s396 + $0x5a] sm:$0x3f] %v691
    %720 = vst [vmem:[%s396 + $0x62] sm:$0xff] %v692
    %721 = vst [vmem:[%s396 + $0x6a] sm:$0x3f] %v693
    %722 = vst [vmem:[%s396 + $0x72] sm:$0xff] %v694
    %723 = vst [vmem:[%s396 + $0x7a] sm:$0x3f] %v695
    %724 = vst [vmem:[%s396 + $0x82] sm:$0xff] %v696
    %725 = vst [vmem:[%s396 + $0x8a] sm:$0x3f] %v697
    %726 = vst [vmem:[%s396 + $0x92] sm:$0xff] %v698
    %727 = vst [vmem:[%s396 + $0x9a] sm:$0x3f] %v699
    %728 = vst [vmem:[%s396 + $0xa2] sm:$0xff] %v700
    %729 = vst [vmem:[%s396 + $0xaa] sm:$0x3f] %v701
    %730 = vst [vmem:[%s396 + $0xb2] sm:$0xff] %v702
    %731 = vst [vmem:[%s396 + $0xba] sm:$0x3f] %v703
    %732 = vst [vmem:[%s396 + $0xc2] sm:$0xff] %v704
    %733 = vst [vmem:[%s396 + $0xca] sm:$0x3f] %v705
    %734 = vst [vmem:[%s396 + $0xd2] sm:$0xff] %v706
    %735 = vst [vmem:[%s396 + $0xda] sm:$0x3f] %v707
    %s736 = scalar_lea.vmem [#allocation2], 32
    %v737 = vld [vmem:[%s736] sm:$0xff]
    %v738 = vld [vmem:[%s736 + $0x8] sm:$0x3f]
    %v739 = vld [vmem:[%s736 + $0x10] sm:$0xff]
    %v740 = vld [vmem:[%s736 + $0x18] sm:$0x3f]
    %v741 = vld [vmem:[%s736 + $0x20] sm:$0xff]
    %v742 = vld [vmem:[%s736 + $0x28] sm:$0x3f]
    %v743 = vld [vmem:[%s736 + $0x30] sm:$0xff]
    %v744 = vld [vmem:[%s736 + $0x38] sm:$0x3f]
    %v745 = vld [vmem:[%s736 + $0x40] sm:$0xff]
    %v746 = vld [vmem:[%s736 + $0x48] sm:$0x3f]
    %v747 = vld [vmem:[%s736 + $0x50] sm:$0xff]
    %v748 = vld [vmem:[%s736 + $0x58] sm:$0x3f]
    %v749 = vld [vmem:[%s736 + $0x60] sm:$0xff]
    %v750 = vld [vmem:[%s736 + $0x68] sm:$0x3f]
    %v751 = vld [vmem:[%s736 + $0x70] sm:$0xff]
    %v752 = vld [vmem:[%s736 + $0x78] sm:$0x3f]
    %v753 = vld [vmem:[%s736 + $0x80] sm:$0xff]
    %v754 = vld [vmem:[%s736 + $0x88] sm:$0x3f]
    %v755 = vld [vmem:[%s736 + $0x90] sm:$0xff]
    %v756 = vld [vmem:[%s736 + $0x98] sm:$0x3f]
    %v757 = vld [vmem:[%s736 + $0xa0] sm:$0xff]
    %v758 = vld [vmem:[%s736 + $0xa8] sm:$0x3f]
    %v759 = vld [vmem:[%s736 + $0xb0] sm:$0xff]
    %v760 = vld [vmem:[%s736 + $0xb8] sm:$0x3f]
    %v761 = vld [vmem:[%s736 + $0xc0] sm:$0xff]
    %v762 = vld [vmem:[%s736 + $0xc8] sm:$0x3f]
    %v763 = vld [vmem:[%s736 + $0xd0] sm:$0xff]
    %v764 = vld [vmem:[%s736 + $0xd8] sm:$0x3f]
    %s765 = scalar_lea.vmem [#allocation3], 1344
    %v766 = vld [vmem:[%s765] sm:$0xff]
    %v767 = vld [vmem:[%s765 + $0x8] sm:$0x3f]
    %v768 = vld [vmem:[%s765 + $0x10] sm:$0xff]
    %v769 = vld [vmem:[%s765 + $0x18] sm:$0x3f]
    %v770 = vld [vmem:[%s765 + $0x20] sm:$0xff]
    %v771 = vld [vmem:[%s765 + $0x28] sm:$0x3f]
    %v772 = vld [vmem:[%s765 + $0x30] sm:$0xff]
    %v773 = vld [vmem:[%s765 + $0x38] sm:$0x3f]
    %v774 = vld [vmem:[%s765 + $0x40] sm:$0xff]
    %v775 = vld [vmem:[%s765 + $0x48] sm:$0x3f]
    %v776 = vld [vmem:[%s765 + $0x50] sm:$0xff]
    %v777 = vld [vmem:[%s765 + $0x58] sm:$0x3f]
    %v778 = vld [vmem:[%s765 + $0x60] sm:$0xff]
    %v779 = vld [vmem:[%s765 + $0x68] sm:$0x3f]
    %v780 = vld [vmem:[%s765 + $0x70] sm:$0xff]
    %v781 = vld [vmem:[%s765 + $0x78] sm:$0x3f]
    %v782 = vld [vmem:[%s765 + $0x80] sm:$0xff]
    %v783 = vld [vmem:[%s765 + $0x88] sm:$0x3f]
    %v784 = vld [vmem:[%s765 + $0x90] sm:$0xff]
    %v785 = vld [vmem:[%s765 + $0x98] sm:$0x3f]
    %v786 = vld [vmem:[%s765 + $0xa0] sm:$0xff]
    %v787 = vld [vmem:[%s765 + $0xa8] sm:$0x3f]
    %v788 = vld [vmem:[%s765 + $0xb0] sm:$0xff]
    %v789 = vld [vmem:[%s765 + $0xb8] sm:$0x3f]
    %v790 = vld [vmem:[%s765 + $0xc0] sm:$0xff]
    %v791 = vld [vmem:[%s765 + $0xc8] sm:$0x3f]
    %v792 = vld [vmem:[%s765 + $0xd0] sm:$0xff]
    %v793 = vld [vmem:[%s765 + $0xd8] sm:$0x3f]
    %v794 = vadd.f32 %v737, %v766
    %v795 = vadd.f32 %v738, %v767
    %v796 = vadd.f32 %v739, %v768
    %v797 = vadd.f32 %v740, %v769
    %v798 = vadd.f32 %v741, %v770
    %v799 = vadd.f32 %v742, %v771
    %v800 = vadd.f32 %v743, %v772
    %v801 = vadd.f32 %v744, %v773
    %v802 = vadd.f32 %v745, %v774
    %v803 = vadd.f32 %v746, %v775
    %v804 = vadd.f32 %v747, %v776
    %v805 = vadd.f32 %v748, %v777
    %v806 = vadd.f32 %v749, %v778
    %v807 = vadd.f32 %v750, %v779
    %v808 = vadd.f32 %v751, %v780
    %v809 = vadd.f32 %v752, %v781
    %v810 = vadd.f32 %v753, %v782
    %v811 = vadd.f32 %v754, %v783
    %v812 = vadd.f32 %v755, %v784
    %v813 = vadd.f32 %v756, %v785
    %v814 = vadd.f32 %v757, %v786
    %v815 = vadd.f32 %v758, %v787
    %v816 = vadd.f32 %v759, %v788
    %v817 = vadd.f32 %v760, %v789
    %v818 = vadd.f32 %v761, %v790
    %v819 = vadd.f32 %v762, %v791
    %v820 = vadd.f32 %v763, %v792
    %v821 = vadd.f32 %v764, %v793
    %822 = vst [vmem:[%s736] sm:$0xff] %v794
    %823 = vst [vmem:[%s736 + $0x8] sm:$0x3f] %v795
    %824 = vst [vmem:[%s736 + $0x10] sm:$0xff] %v796
    %825 = vst [vmem:[%s736 + $0x18] sm:$0x3f] %v797
    %826 = vst [vmem:[%s736 + $0x20] sm:$0xff] %v798
    %827 = vst [vmem:[%s736 + $0x28] sm:$0x3f] %v799
    %828 = vst [vmem:[%s736 + $0x30] sm:$0xff] %v800
    %829 = vst [vmem:[%s736 + $0x38] sm:$0x3f] %v801
    %830 = vst [vmem:[%s736 + $0x40] sm:$0xff] %v802
    %831 = vst [vmem:[%s736 + $0x48] sm:$0x3f] %v803
    %832 = vst [vmem:[%s736 + $0x50] sm:$0xff] %v804
    %833 = vst [vmem:[%s736 + $0x58] sm:$0x3f] %v805
    %834 = vst [vmem:[%s736 + $0x60] sm:$0xff] %v806
    %835 = vst [vmem:[%s736 + $0x68] sm:$0x3f] %v807
    %836 = vst [vmem:[%s736 + $0x70] sm:$0xff] %v808
    %837 = vst [vmem:[%s736 + $0x78] sm:$0x3f] %v809
    %838 = vst [vmem:[%s736 + $0x80] sm:$0xff] %v810
    %839 = vst [vmem:[%s736 + $0x88] sm:$0x3f] %v811
    %840 = vst [vmem:[%s736 + $0x90] sm:$0xff] %v812
    %841 = vst [vmem:[%s736 + $0x98] sm:$0x3f] %v813
    %842 = vst [vmem:[%s736 + $0xa0] sm:$0xff] %v814
    %843 = vst [vmem:[%s736 + $0xa8] sm:$0x3f] %v815
    %844 = vst [vmem:[%s736 + $0xb0] sm:$0xff] %v816
    %845 = vst [vmem:[%s736 + $0xb8] sm:$0x3f] %v817
    %846 = vst [vmem:[%s736 + $0xc0] sm:$0xff] %v818
    %847 = vst [vmem:[%s736 + $0xc8] sm:$0x3f] %v819
    %848 = vst [vmem:[%s736 + $0xd0] sm:$0xff] %v820
    %849 = vst [vmem:[%s736 + $0xd8] sm:$0x3f] %v821
    %v850 = vld [vmem:[%s736 + $0x1] sm:$0xff]
    %v851 = vld [vmem:[%s736 + $0x9] sm:$0x3f]
    %v852 = vld [vmem:[%s736 + $0x11] sm:$0xff]
    %v853 = vld [vmem:[%s736 + $0x19] sm:$0x3f]
    %v854 = vld [vmem:[%s736 + $0x21] sm:$0xff]
    %v855 = vld [vmem:[%s736 + $0x29] sm:$0x3f]
    %v856 = vld [vmem:[%s736 + $0x31] sm:$0xff]
    %v857 = vld [vmem:[%s736 + $0x39] sm:$0x3f]
    %v858 = vld [vmem:[%s736 + $0x41] sm:$0xff]
    %v859 = vld [vmem:[%s736 + $0x49] sm:$0x3f]
    %v860 = vld [vmem:[%s736 + $0x51] sm:$0xff]
    %v861 = vld [vmem:[%s736 + $0x59] sm:$0x3f]
    %v862 = vld [vmem:[%s736 + $0x61] sm:$0xff]
    %v863 = vld [vmem:[%s736 + $0x69] sm:$0x3f]
    %v864 = vld [vmem:[%s736 + $0x71] sm:$0xff]
    %v865 = vld [vmem:[%s736 + $0x79] sm:$0x3f]
    %v866 = vld [vmem:[%s736 + $0x81] sm:$0xff]
    %v867 = vld [vmem:[%s736 + $0x89] sm:$0x3f]
    %v868 = vld [vmem:[%s736 + $0x91] sm:$0xff]
    %v869 = vld [vmem:[%s736 + $0x99] sm:$0x3f]
    %v870 = vld [vmem:[%s736 + $0xa1] sm:$0xff]
    %v871 = vld [vmem:[%s736 + $0xa9] sm:$0x3f]
    %v872 = vld [vmem:[%s736 + $0xb1] sm:$0xff]
    %v873 = vld [vmem:[%s736 + $0xb9] sm:$0x3f]
    %v874 = vld [vmem:[%s736 + $0xc1] sm:$0xff]
    %v875 = vld [vmem:[%s736 + $0xc9] sm:$0x3f]
    %v876 = vld [vmem:[%s736 + $0xd1] sm:$0xff]
    %v877 = vld [vmem:[%s736 + $0xd9] sm:$0x3f]
    %s878 = scalar_lea.vmem [#allocation3], 1568
    %v879 = vld [vmem:[%s878] sm:$0xff]
    %v880 = vld [vmem:[%s878 + $0x8] sm:$0x3f]
    %v881 = vld [vmem:[%s878 + $0x10] sm:$0xff]
    %v882 = vld [vmem:[%s878 + $0x18] sm:$0x3f]
    %v883 = vld [vmem:[%s878 + $0x20] sm:$0xff]
    %v884 = vld [vmem:[%s878 + $0x28] sm:$0x3f]
    %v885 = vld [vmem:[%s878 + $0x30] sm:$0xff]
    %v886 = vld [vmem:[%s878 + $0x38] sm:$0x3f]
    %v887 = vld [vmem:[%s878 + $0x40] sm:$0xff]
    %v888 = vld [vmem:[%s878 + $0x48] sm:$0x3f]
    %v889 = vld [vmem:[%s878 + $0x50] sm:$0xff]
    %v890 = vld [vmem:[%s878 + $0x58] sm:$0x3f]
    %v891 = vld [vmem:[%s878 + $0x60] sm:$0xff]
    %v892 = vld [vmem:[%s878 + $0x68] sm:$0x3f]
    %v893 = vld [vmem:[%s878 + $0x70] sm:$0xff]
    %v894 = vld [vmem:[%s878 + $0x78] sm:$0x3f]
    %v895 = vld [vmem:[%s878 + $0x80] sm:$0xff]
    %v896 = vld [vmem:[%s878 + $0x88] sm:$0x3f]
    %v897 = vld [vmem:[%s878 + $0x90] sm:$0xff]
    %v898 = vld [vmem:[%s878 + $0x98] sm:$0x3f]
    %v899 = vld [vmem:[%s878 + $0xa0] sm:$0xff]
    %v900 = vld [vmem:[%s878 + $0xa8] sm:$0x3f]
    %v901 = vld [vmem:[%s878 + $0xb0] sm:$0xff]
    %v902 = vld [vmem:[%s878 + $0xb8] sm:$0x3f]
    %v903 = vld [vmem:[%s878 + $0xc0] sm:$0xff]
    %v904 = vld [vmem:[%s878 + $0xc8] sm:$0x3f]
    %v905 = vld [vmem:[%s878 + $0xd0] sm:$0xff]
    %v906 = vld [vmem:[%s878 + $0xd8] sm:$0x3f]
    %v907 = vadd.f32 %v850, %v879
    %v908 = vadd.f32 %v851, %v880
    %v909 = vadd.f32 %v852, %v881
    %v910 = vadd.f32 %v853, %v882
    %v911 = vadd.f32 %v854, %v883
    %v912 = vadd.f32 %v855, %v884
    %v913 = vadd.f32 %v856, %v885
    %v914 = vadd.f32 %v857, %v886
    %v915 = vadd.f32 %v858, %v887
    %v916 = vadd.f32 %v859, %v888
    %v917 = vadd.f32 %v860, %v889
    %v918 = vadd.f32 %v861, %v890
    %v919 = vadd.f32 %v862, %v891
    %v920 = vadd.f32 %v863, %v892
    %v921 = vadd.f32 %v864, %v893
    %v922 = vadd.f32 %v865, %v894
    %v923 = vadd.f32 %v866, %v895
    %v924 = vadd.f32 %v867, %v896
    %v925 = vadd.f32 %v868, %v897
    %v926 = vadd.f32 %v869, %v898
    %v927 = vadd.f32 %v870, %v899
    %v928 = vadd.f32 %v871, %v900
    %v929 = vadd.f32 %v872, %v901
    %v930 = vadd.f32 %v873, %v902
    %v931 = vadd.f32 %v874, %v903
    %v932 = vadd.f32 %v875, %v904
    %v933 = vadd.f32 %v876, %v905
    %v934 = vadd.f32 %v877, %v906
    %935 = vst [vmem:[%s736 + $0x1] sm:$0xff] %v907
    %936 = vst [vmem:[%s736 + $0x9] sm:$0x3f] %v908
    %937 = vst [vmem:[%s736 + $0x11] sm:$0xff] %v909
    %938 = vst [vmem:[%s736 + $0x19] sm:$0x3f] %v910
    %939 = vst [vmem:[%s736 + $0x21] sm:$0xff] %v911
    %940 = vst [vmem:[%s736 + $0x29] sm:$0x3f] %v912
    %941 = vst [vmem:[%s736 + $0x31] sm:$0xff] %v913
    %942 = vst [vmem:[%s736 + $0x39] sm:$0x3f] %v914
    %943 = vst [vmem:[%s736 + $0x41] sm:$0xff] %v915
    %944 = vst [vmem:[%s736 + $0x49] sm:$0x3f] %v916
    %945 = vst [vmem:[%s736 + $0x51] sm:$0xff] %v917
    %946 = vst [vmem:[%s736 + $0x59] sm:$0x3f] %v918
    %947 = vst [vmem:[%s736 + $0x61] sm:$0xff] %v919
    %948 = vst [vmem:[%s736 + $0x69] sm:$0x3f] %v920
    %949 = vst [vmem:[%s736 + $0x71] sm:$0xff] %v921
    %950 = vst [vmem:[%s736 + $0x79] sm:$0x3f] %v922
    %951 = vst [vmem:[%s736 + $0x81] sm:$0xff] %v923
    %952 = vst [vmem:[%s736 + $0x89] sm:$0x3f] %v924
    %953 = vst [vmem:[%s736 + $0x91] sm:$0xff] %v925
    %954 = vst [vmem:[%s736 + $0x99] sm:$0x3f] %v926
    %955 = vst [vmem:[%s736 + $0xa1] sm:$0xff] %v927
    %956 = vst [vmem:[%s736 + $0xa9] sm:$0x3f] %v928
    %957 = vst [vmem:[%s736 + $0xb1] sm:$0xff] %v929
    %958 = vst [vmem:[%s736 + $0xb9] sm:$0x3f] %v930
    %959 = vst [vmem:[%s736 + $0xc1] sm:$0xff] %v931
    %960 = vst [vmem:[%s736 + $0xc9] sm:$0x3f] %v932
    %961 = vst [vmem:[%s736 + $0xd1] sm:$0xff] %v933
    %962 = vst [vmem:[%s736 + $0xd9] sm:$0x3f] %v934
    %v963 = vld [vmem:[%s736 + $0x2] sm:$0xff]
    %v964 = vld [vmem:[%s736 + $0xa] sm:$0x3f]
    %v965 = vld [vmem:[%s736 + $0x12] sm:$0xff]
    %v966 = vld [vmem:[%s736 + $0x1a] sm:$0x3f]
    %v967 = vld [vmem:[%s736 + $0x22] sm:$0xff]
    %v968 = vld [vmem:[%s736 + $0x2a] sm:$0x3f]
    %v969 = vld [vmem:[%s736 + $0x32] sm:$0xff]
    %v970 = vld [vmem:[%s736 + $0x3a] sm:$0x3f]
    %v971 = vld [vmem:[%s736 + $0x42] sm:$0xff]
    %v972 = vld [vmem:[%s736 + $0x4a] sm:$0x3f]
    %v973 = vld [vmem:[%s736 + $0x52] sm:$0xff]
    %v974 = vld [vmem:[%s736 + $0x5a] sm:$0x3f]
    %v975 = vld [vmem:[%s736 + $0x62] sm:$0xff]
    %v976 = vld [vmem:[%s736 + $0x6a] sm:$0x3f]
    %v977 = vld [vmem:[%s736 + $0x72] sm:$0xff]
    %v978 = vld [vmem:[%s736 + $0x7a] sm:$0x3f]
    %v979 = vld [vmem:[%s736 + $0x82] sm:$0xff]
    %v980 = vld [vmem:[%s736 + $0x8a] sm:$0x3f]
    %v981 = vld [vmem:[%s736 + $0x92] sm:$0xff]
    %v982 = vld [vmem:[%s736 + $0x9a] sm:$0x3f]
    %v983 = vld [vmem:[%s736 + $0xa2] sm:$0xff]
    %v984 = vld [vmem:[%s736 + $0xaa] sm:$0x3f]
    %v985 = vld [vmem:[%s736 + $0xb2] sm:$0xff]
    %v986 = vld [vmem:[%s736 + $0xba] sm:$0x3f]
    %v987 = vld [vmem:[%s736 + $0xc2] sm:$0xff]
    %v988 = vld [vmem:[%s736 + $0xca] sm:$0x3f]
    %v989 = vld [vmem:[%s736 + $0xd2] sm:$0xff]
    %v990 = vld [vmem:[%s736 + $0xda] sm:$0x3f]
    %s991 = scalar_lea.vmem [#allocation3], 1792
    %v992 = vld [vmem:[%s991] sm:$0xff]
    %v993 = vld [vmem:[%s991 + $0x8] sm:$0x3f]
    %v994 = vld [vmem:[%s991 + $0x10] sm:$0xff]
    %v995 = vld [vmem:[%s991 + $0x18] sm:$0x3f]
    %v996 = vld [vmem:[%s991 + $0x20] sm:$0xff]
    %v997 = vld [vmem:[%s991 + $0x28] sm:$0x3f]
    %v998 = vld [vmem:[%s991 + $0x30] sm:$0xff]
    %v999 = vld [vmem:[%s991 + $0x38] sm:$0x3f]
    %v1000 = vld [vmem:[%s991 + $0x40] sm:$0xff]
    %v1001 = vld [vmem:[%s991 + $0x48] sm:$0x3f]
    %v1002 = vld [vmem:[%s991 + $0x50] sm:$0xff]
    %v1003 = vld [vmem:[%s991 + $0x58] sm:$0x3f]
    %v1004 = vld [vmem:[%s991 + $0x60] sm:$0xff]
    %v1005 = vld [vmem:[%s991 + $0x68] sm:$0x3f]
    %v1006 = vld [vmem:[%s991 + $0x70] sm:$0xff]
    %v1007 = vld [vmem:[%s991 + $0x78] sm:$0x3f]
    %v1008 = vld [vmem:[%s991 + $0x80] sm:$0xff]
    %v1009 = vld [vmem:[%s991 + $0x88] sm:$0x3f]
    %v1010 = vld [vmem:[%s991 + $0x90] sm:$0xff]
    %v1011 = vld [vmem:[%s991 + $0x98] sm:$0x3f]
    %v1012 = vld [vmem:[%s991 + $0xa0] sm:$0xff]
    %v1013 = vld [vmem:[%s991 + $0xa8] sm:$0x3f]
    %v1014 = vld [vmem:[%s991 + $0xb0] sm:$0xff]
    %v1015 = vld [vmem:[%s991 + $0xb8] sm:$0x3f]
    %v1016 = vld [vmem:[%s991 + $0xc0] sm:$0xff]
    %v1017 = vld [vmem:[%s991 + $0xc8] sm:$0x3f]
    %v1018 = vld [vmem:[%s991 + $0xd0] sm:$0xff]
    %v1019 = vld [vmem:[%s991 + $0xd8] sm:$0x3f]
    %v1020 = vadd.f32 %v963, %v992
    %v1021 = vadd.f32 %v964, %v993
    %v1022 = vadd.f32 %v965, %v994
    %v1023 = vadd.f32 %v966, %v995
    %v1024 = vadd.f32 %v967, %v996
    %v1025 = vadd.f32 %v968, %v997
    %v1026 = vadd.f32 %v969, %v998
    %v1027 = vadd.f32 %v970, %v999
    %v1028 = vadd.f32 %v971, %v1000
    %v1029 = vadd.f32 %v972, %v1001
    %v1030 = vadd.f32 %v973, %v1002
    %v1031 = vadd.f32 %v974, %v1003
    %v1032 = vadd.f32 %v975, %v1004
    %v1033 = vadd.f32 %v976, %v1005
    %v1034 = vadd.f32 %v977, %v1006
    %v1035 = vadd.f32 %v978, %v1007
    %v1036 = vadd.f32 %v979, %v1008
    %v1037 = vadd.f32 %v980, %v1009
    %v1038 = vadd.f32 %v981, %v1010
    %v1039 = vadd.f32 %v982, %v1011
    %v1040 = vadd.f32 %v983, %v1012
    %v1041 = vadd.f32 %v984, %v1013
    %v1042 = vadd.f32 %v985, %v1014
    %v1043 = vadd.f32 %v986, %v1015
    %v1044 = vadd.f32 %v987, %v1016
    %v1045 = vadd.f32 %v988, %v1017
    %v1046 = vadd.f32 %v989, %v1018
    %v1047 = vadd.f32 %v990, %v1019
    %1048 = vst [vmem:[%s736 + $0x2] sm:$0xff] %v1020
    %1049 = vst [vmem:[%s736 + $0xa] sm:$0x3f] %v1021
    %1050 = vst [vmem:[%s736 + $0x12] sm:$0xff] %v1022
    %1051 = vst [vmem:[%s736 + $0x1a] sm:$0x3f] %v1023
    %1052 = vst [vmem:[%s736 + $0x22] sm:$0xff] %v1024
    %1053 = vst [vmem:[%s736 + $0x2a] sm:$0x3f] %v1025
    %1054 = vst [vmem:[%s736 + $0x32] sm:$0xff] %v1026
    %1055 = vst [vmem:[%s736 + $0x3a] sm:$0x3f] %v1027
    %1056 = vst [vmem:[%s736 + $0x42] sm:$0xff] %v1028
    %1057 = vst [vmem:[%s736 + $0x4a] sm:$0x3f] %v1029
    %1058 = vst [vmem:[%s736 + $0x52] sm:$0xff] %v1030
    %1059 = vst [vmem:[%s736 + $0x5a] sm:$0x3f] %v1031
    %1060 = vst [vmem:[%s736 + $0x62] sm:$0xff] %v1032
    %1061 = vst [vmem:[%s736 + $0x6a] sm:$0x3f] %v1033
    %1062 = vst [vmem:[%s736 + $0x72] sm:$0xff] %v1034
    %1063 = vst [vmem:[%s736 + $0x7a] sm:$0x3f] %v1035
    %1064 = vst [vmem:[%s736 + $0x82] sm:$0xff] %v1036
    %1065 = vst [vmem:[%s736 + $0x8a] sm:$0x3f] %v1037
    %1066 = vst [vmem:[%s736 + $0x92] sm:$0xff] %v1038
    %1067 = vst [vmem:[%s736 + $0x9a] sm:$0x3f] %v1039
    %1068 = vst [vmem:[%s736 + $0xa2] sm:$0xff] %v1040
    %1069 = vst [vmem:[%s736 + $0xaa] sm:$0x3f] %v1041
    %1070 = vst [vmem:[%s736 + $0xb2] sm:$0xff] %v1042
    %1071 = vst [vmem:[%s736 + $0xba] sm:$0x3f] %v1043
    %1072 = vst [vmem:[%s736 + $0xc2] sm:$0xff] %v1044
    %1073 = vst [vmem:[%s736 + $0xca] sm:$0x3f] %v1045
    %1074 = vst [vmem:[%s736 + $0xd2] sm:$0xff] %v1046
    %1075 = vst [vmem:[%s736 + $0xda] sm:$0x3f] %v1047
    %v1076 = vld [vmem:[#allocation2] sm:$0xff]
    %v1077 = vld [vmem:[#allocation2 + $0x8] sm:$0xff]
    %v1078 = vld [vmem:[#allocation2 + $0x10] sm:$0xff]
    %v1079 = vld [vmem:[#allocation2 + $0x18] sm:$0xff]
    %v1080 = vld [vmem:[#allocation2 + $0x20] sm:$0xff]
    %v1081 = vld [vmem:[#allocation2 + $0x28] sm:$0xff]
    %v1082 = vld [vmem:[#allocation2 + $0x30] sm:$0xff]
    %v1083 = vld [vmem:[#allocation2 + $0x38] sm:$0xff]
    %v1084 = vld [vmem:[#allocation2 + $0x40] sm:$0xff]
    %v1085 = vld [vmem:[#allocation2 + $0x48] sm:$0xff]
    %v1086 = vld [vmem:[#allocation2 + $0x50] sm:$0xff]
    %v1087 = vld [vmem:[#allocation2 + $0x58] sm:$0xff]
    %v1088 = vld [vmem:[#allocation2 + $0x60] sm:$0xff]
    %v1089 = vld [vmem:[#allocation2 + $0x68] sm:$0xff]
    %v1090 = vld [vmem:[#allocation2 + $0x70] sm:$0xff]
    %v1091 = vld [vmem:[#allocation2 + $0x78] sm:$0xff]
    %v1092 = vld [vmem:[#allocation2 + $0x80] sm:$0xff]
    %v1093 = vld [vmem:[#allocation2 + $0x88] sm:$0xff]
    %v1094 = vld [vmem:[#allocation2 + $0x90] sm:$0xff]
    %v1095 = vld [vmem:[#allocation2 + $0x98] sm:$0xff]
    %v1096 = vld [vmem:[#allocation2 + $0xa0] sm:$0xff]
    %v1097 = vld [vmem:[#allocation2 + $0xa8] sm:$0xff]
    %v1098 = vld [vmem:[#allocation2 + $0xb0] sm:$0xff]
    %v1099 = vld [vmem:[#allocation2 + $0xb8] sm:$0xff]
    %v1100 = vld [vmem:[#allocation2 + $0xc0] sm:$0xff]
    %v1101 = vld [vmem:[#allocation2 + $0xc8] sm:$0xff]
    %v1102 = vld [vmem:[#allocation2 + $0xd0] sm:$0xff]
    %v1103 = vld [vmem:[#allocation2 + $0xd8] sm:$0xff]
    %v1104 = vld [vmem:[#allocation2 + $0xe0] sm:$0xff]
    %v1105 = vld [vmem:[#allocation2 + $0xe8] sm:$0xff]
    %v1106 = vld [vmem:[#allocation2 + $0xf0] sm:$0xff]
    %v1107 = vld [vmem:[#allocation2 + $0xf8] sm:$0xff]
    %v1108 = vld [vmem:[%s1] sm:$0xff]
    %v1109 = vld [vmem:[%s1 + $0x8] sm:$0xff]
    %v1110 = vld [vmem:[%s1 + $0x10] sm:$0xff]
    %v1111 = vld [vmem:[%s1 + $0x18] sm:$0xff]
    %v1112 = vld [vmem:[%s1 + $0x20] sm:$0xff]
    %v1113 = vld [vmem:[%s1 + $0x28] sm:$0xff]
    %v1114 = vld [vmem:[%s1 + $0x30] sm:$0xff]
    %v1115 = vld [vmem:[%s1 + $0x38] sm:$0xff]
    %v1116 = vld [vmem:[%s1 + $0x40] sm:$0xff]
    %v1117 = vld [vmem:[%s1 + $0x48] sm:$0xff]
    %v1118 = vld [vmem:[%s1 + $0x50] sm:$0xff]
    %v1119 = vld [vmem:[%s1 + $0x58] sm:$0xff]
    %v1120 = vld [vmem:[%s1 + $0x60] sm:$0xff]
    %v1121 = vld [vmem:[%s1 + $0x68] sm:$0xff]
    %v1122 = vld [vmem:[%s1 + $0x70] sm:$0xff]
    %v1123 = vld [vmem:[%s1 + $0x78] sm:$0xff]
    %v1124 = vld [vmem:[%s1 + $0x80] sm:$0xff]
    %v1125 = vld [vmem:[%s1 + $0x88] sm:$0xff]
    %v1126 = vld [vmem:[%s1 + $0x90] sm:$0xff]
    %v1127 = vld [vmem:[%s1 + $0x98] sm:$0xff]
    %v1128 = vld [vmem:[%s1 + $0xa0] sm:$0xff]
    %v1129 = vld [vmem:[%s1 + $0xa8] sm:$0xff]
    %v1130 = vld [vmem:[%s1 + $0xb0] sm:$0xff]
    %v1131 = vld [vmem:[%s1 + $0xb8] sm:$0xff]
    %v1132 = vld [vmem:[%s1 + $0xc0] sm:$0xff]
    %v1133 = vld [vmem:[%s1 + $0xc8] sm:$0xff]
    %v1134 = vld [vmem:[%s1 + $0xd0] sm:$0xff]
    %v1135 = vld [vmem:[%s1 + $0xd8] sm:$0xff]
    %v1136 = vld [vmem:[%s1 + $0xe0] sm:$0xff]
    %v1137 = vld [vmem:[%s1 + $0xe8] sm:$0xff]
    %v1138 = vld [vmem:[%s1 + $0xf0] sm:$0xff]
    %v1139 = vld [vmem:[%s1 + $0xf8] sm:$0xff]
    %1141 = vset.pattern.permute.xlu0 0
    %1142 = vperm.xlu0 %1141, %v1108
    %v1143 = vpop.permute.xlu0 %1142
    %1146 = vset.pattern.permute.xlu0 0
    %1147 = vperm.xlu0 %1146, %v1109
    %v1148 = vpop.permute.xlu0 %1147
    %1151 = vset.pattern.permute.xlu0 0
    %1152 = vperm.xlu0 %1151, %v1110
    %v1153 = vpop.permute.xlu0 %1152
    %1156 = vset.pattern.permute.xlu0 0
    %1157 = vperm.xlu0 %1156, %v1111
    %v1158 = vpop.permute.xlu0 %1157
    %1161 = vset.pattern.permute.xlu0 0
    %1162 = vperm.xlu0 %1161, %v1112
    %v1163 = vpop.permute.xlu0 %1162
    %1166 = vset.pattern.permute.xlu0 0
    %1167 = vperm.xlu0 %1166, %v1113
    %v1168 = vpop.permute.xlu0 %1167
    %1171 = vset.pattern.permute.xlu0 0
    %1172 = vperm.xlu0 %1171, %v1114
    %v1173 = vpop.permute.xlu0 %1172
    %1176 = vset.pattern.permute.xlu0 0
    %1177 = vperm.xlu0 %1176, %v1115
    %v1178 = vpop.permute.xlu0 %1177
    %1181 = vset.pattern.permute.xlu0 0
    %1182 = vperm.xlu0 %1181, %v1116
    %v1183 = vpop.permute.xlu0 %1182
    %1186 = vset.pattern.permute.xlu0 0
    %1187 = vperm.xlu0 %1186, %v1117
    %v1188 = vpop.permute.xlu0 %1187
    %1191 = vset.pattern.permute.xlu0 0
    %1192 = vperm.xlu0 %1191, %v1118
    %v1193 = vpop.permute.xlu0 %1192
    %1196 = vset.pattern.permute.xlu0 0
    %1197 = vperm.xlu0 %1196, %v1119
    %v1198 = vpop.permute.xlu0 %1197
    %1201 = vset.pattern.permute.xlu0 0
    %1202 = vperm.xlu0 %1201, %v1120
    %v1203 = vpop.permute.xlu0 %1202
    %1206 = vset.pattern.permute.xlu0 0
    %1207 = vperm.xlu0 %1206, %v1121
    %v1208 = vpop.permute.xlu0 %1207
    %1211 = vset.pattern.permute.xlu0 0
    %1212 = vperm.xlu0 %1211, %v1122
    %v1213 = vpop.permute.xlu0 %1212
    %1216 = vset.pattern.permute.xlu0 0
    %1217 = vperm.xlu0 %1216, %v1123
    %v1218 = vpop.permute.xlu0 %1217
    %1221 = vset.pattern.permute.xlu0 0
    %1222 = vperm.xlu0 %1221, %v1124
    %v1223 = vpop.permute.xlu0 %1222
    %1226 = vset.pattern.permute.xlu0 0
    %1227 = vperm.xlu0 %1226, %v1125
    %v1228 = vpop.permute.xlu0 %1227
    %1231 = vset.pattern.permute.xlu0 0
    %1232 = vperm.xlu0 %1231, %v1126
    %v1233 = vpop.permute.xlu0 %1232
    %1236 = vset.pattern.permute.xlu0 0
    %1237 = vperm.xlu0 %1236, %v1127
    %v1238 = vpop.permute.xlu0 %1237
    %1241 = vset.pattern.permute.xlu0 0
    %1242 = vperm.xlu0 %1241, %v1128
    %v1243 = vpop.permute.xlu0 %1242
    %1246 = vset.pattern.permute.xlu0 0
    %1247 = vperm.xlu0 %1246, %v1129
    %v1248 = vpop.permute.xlu0 %1247
    %1251 = vset.pattern.permute.xlu0 0
    %1252 = vperm.xlu0 %1251, %v1130
    %v1253 = vpop.permute.xlu0 %1252
    %1256 = vset.pattern.permute.xlu0 0
    %1257 = vperm.xlu0 %1256, %v1131
    %v1258 = vpop.permute.xlu0 %1257
    %1261 = vset.pattern.permute.xlu0 0
    %1262 = vperm.xlu0 %1261, %v1132
    %v1263 = vpop.permute.xlu0 %1262
    %1266 = vset.pattern.permute.xlu0 0
    %1267 = vperm.xlu0 %1266, %v1133
    %v1268 = vpop.permute.xlu0 %1267
    %1271 = vset.pattern.permute.xlu0 0
    %1272 = vperm.xlu0 %1271, %v1134
    %v1273 = vpop.permute.xlu0 %1272
    %1276 = vset.pattern.permute.xlu0 0
    %1277 = vperm.xlu0 %1276, %v1135
    %v1278 = vpop.permute.xlu0 %1277
    %1281 = vset.pattern.permute.xlu0 0
    %1282 = vperm.xlu0 %1281, %v1136
    %v1283 = vpop.permute.xlu0 %1282
    %1286 = vset.pattern.permute.xlu0 0
    %1287 = vperm.xlu0 %1286, %v1137
    %v1288 = vpop.permute.xlu0 %1287
    %1291 = vset.pattern.permute.xlu0 0
    %1292 = vperm.xlu0 %1291, %v1138
    %v1293 = vpop.permute.xlu0 %1292
    %1296 = vset.pattern.permute.xlu0 0
    %1297 = vperm.xlu0 %1296, %v1139
    %v1298 = vpop.permute.xlu0 %1297
    %v1300 = vmul.f32 %v1076, %v1143
    %v1301 = vmul.f32 %v1077, %v1148
    %v1302 = vmul.f32 %v1078, %v1153
    %v1303 = vmul.f32 %v1079, %v1158
    %v1304 = vmul.f32 %v1080, %v1163
    %v1305 = vmul.f32 %v1081, %v1168
    %v1306 = vmul.f32 %v1082, %v1173
    %v1307 = vmul.f32 %v1083, %v1178
    %v1308 = vmul.f32 %v1084, %v1183
    %v1309 = vmul.f32 %v1085, %v1188
    %v1310 = vmul.f32 %v1086, %v1193
    %v1311 = vmul.f32 %v1087, %v1198
    %v1312 = vmul.f32 %v1088, %v1203
    %v1313 = vmul.f32 %v1089, %v1208
    %v1314 = vmul.f32 %v1090, %v1213
    %v1315 = vmul.f32 %v1091, %v1218
    %v1316 = vmul.f32 %v1092, %v1223
    %v1317 = vmul.f32 %v1093, %v1228
    %v1318 = vmul.f32 %v1094, %v1233
    %v1319 = vmul.f32 %v1095, %v1238
    %v1320 = vmul.f32 %v1096, %v1243
    %v1321 = vmul.f32 %v1097, %v1248
    %v1322 = vmul.f32 %v1098, %v1253
    %v1323 = vmul.f32 %v1099, %v1258
    %v1324 = vmul.f32 %v1100, %v1263
    %v1325 = vmul.f32 %v1101, %v1268
    %v1326 = vmul.f32 %v1102, %v1273
    %v1327 = vmul.f32 %v1103, %v1278
    %v1328 = vmul.f32 %v1104, %v1283
    %v1329 = vmul.f32 %v1105, %v1288
    %v1330 = vmul.f32 %v1106, %v1293
    %v1331 = vmul.f32 %v1107, %v1298
    %1332 = vst [vmem:[#allocation2] sm:$0xff] %v1300
    %1333 = vst [vmem:[#allocation2 + $0x8] sm:$0xff] %v1301
    %1334 = vst [vmem:[#allocation2 + $0x10] sm:$0xff] %v1302
    %1335 = vst [vmem:[#allocation2 + $0x18] sm:$0xff] %v1303
    %1336 = vst [vmem:[#allocation2 + $0x20] sm:$0xff] %v1304
    %1337 = vst [vmem:[#allocation2 + $0x28] sm:$0xff] %v1305
    %1338 = vst [vmem:[#allocation2 + $0x30] sm:$0xff] %v1306
    %1339 = vst [vmem:[#allocation2 + $0x38] sm:$0xff] %v1307
    %1340 = vst [vmem:[#allocation2 + $0x40] sm:$0xff] %v1308
    %1341 = vst [vmem:[#allocation2 + $0x48] sm:$0xff] %v1309
    %1342 = vst [vmem:[#allocation2 + $0x50] sm:$0xff] %v1310
    %1343 = vst [vmem:[#allocation2 + $0x58] sm:$0xff] %v1311
    %1344 = vst [vmem:[#allocation2 + $0x60] sm:$0xff] %v1312
    %1345 = vst [vmem:[#allocation2 + $0x68] sm:$0xff] %v1313
    %1346 = vst [vmem:[#allocation2 + $0x70] sm:$0xff] %v1314
    %1347 = vst [vmem:[#allocation2 + $0x78] sm:$0xff] %v1315
    %1348 = vst [vmem:[#allocation2 + $0x80] sm:$0xff] %v1316
    %1349 = vst [vmem:[#allocation2 + $0x88] sm:$0xff] %v1317
    %1350 = vst [vmem:[#allocation2 + $0x90] sm:$0xff] %v1318
    %1351 = vst [vmem:[#allocation2 + $0x98] sm:$0xff] %v1319
    %1352 = vst [vmem:[#allocation2 + $0xa0] sm:$0xff] %v1320
    %1353 = vst [vmem:[#allocation2 + $0xa8] sm:$0xff] %v1321
    %1354 = vst [vmem:[#allocation2 + $0xb0] sm:$0xff] %v1322
    %1355 = vst [vmem:[#allocation2 + $0xb8] sm:$0xff] %v1323
    %1356 = vst [vmem:[#allocation2 + $0xc0] sm:$0xff] %v1324
    %1357 = vst [vmem:[#allocation2 + $0xc8] sm:$0xff] %v1325
    %1358 = vst [vmem:[#allocation2 + $0xd0] sm:$0xff] %v1326
    %1359 = vst [vmem:[#allocation2 + $0xd8] sm:$0xff] %v1327
    %1360 = vst [vmem:[#allocation2 + $0xe0] sm:$0xff] %v1328
    %1361 = vst [vmem:[#allocation2 + $0xe8] sm:$0xff] %v1329
    %1362 = vst [vmem:[#allocation2 + $0xf0] sm:$0xff] %v1330
    %1363 = vst [vmem:[#allocation2 + $0xf8] sm:$0xff] %v1331
    %v1364 = vld [vmem:[#allocation2] sm:$0xff]
    %v1365 = vld [vmem:[#allocation2 + $0x8] sm:$0x3f]
    %v1366 = vld [vmem:[#allocation2 + $0x10] sm:$0xff]
    %v1367 = vld [vmem:[#allocation2 + $0x18] sm:$0x3f]
    %v1368 = vld [vmem:[#allocation2 + $0x20] sm:$0xff]
    %v1369 = vld [vmem:[#allocation2 + $0x28] sm:$0x3f]
    %v1370 = vld [vmem:[#allocation2 + $0x30] sm:$0xff]
    %v1371 = vld [vmem:[#allocation2 + $0x38] sm:$0x3f]
    %v1372 = vld [vmem:[#allocation2 + $0x40] sm:$0xff]
    %v1373 = vld [vmem:[#allocation2 + $0x48] sm:$0x3f]
    %v1374 = vld [vmem:[#allocation2 + $0x50] sm:$0xff]
    %v1375 = vld [vmem:[#allocation2 + $0x58] sm:$0x3f]
    %v1376 = vld [vmem:[#allocation2 + $0x60] sm:$0xff]
    %v1377 = vld [vmem:[#allocation2 + $0x68] sm:$0x3f]
    %v1378 = vld [vmem:[#allocation2 + $0x70] sm:$0xff]
    %v1379 = vld [vmem:[#allocation2 + $0x78] sm:$0x3f]
    %v1380 = vld [vmem:[#allocation2 + $0x80] sm:$0xff]
    %v1381 = vld [vmem:[#allocation2 + $0x88] sm:$0x3f]
    %v1382 = vld [vmem:[#allocation2 + $0x90] sm:$0xff]
    %v1383 = vld [vmem:[#allocation2 + $0x98] sm:$0x3f]
    %v1384 = vld [vmem:[#allocation2 + $0xa0] sm:$0xff]
    %v1385 = vld [vmem:[#allocation2 + $0xa8] sm:$0x3f]
    %v1386 = vld [vmem:[#allocation2 + $0xb0] sm:$0xff]
    %v1387 = vld [vmem:[#allocation2 + $0xb8] sm:$0x3f]
    %v1388 = vld [vmem:[#allocation2 + $0xc0] sm:$0xff]
    %v1389 = vld [vmem:[#allocation2 + $0xc8] sm:$0x3f]
    %v1390 = vld [vmem:[#allocation2 + $0xd0] sm:$0xff]
    %v1391 = vld [vmem:[#allocation2 + $0xd8] sm:$0x3f]
    %1392 = vst [vmem:[#allocation6] sm:$0xff] %v1364
    %1393 = vst [vmem:[#allocation6 + $0x8] sm:$0x3f] %v1365
    %1394 = vst [vmem:[#allocation6 + $0x10] sm:$0xff] %v1366
    %1395 = vst [vmem:[#allocation6 + $0x18] sm:$0x3f] %v1367
    %1396 = vst [vmem:[#allocation6 + $0x20] sm:$0xff] %v1368
    %1397 = vst [vmem:[#allocation6 + $0x28] sm:$0x3f] %v1369
    %1398 = vst [vmem:[#allocation6 + $0x30] sm:$0xff] %v1370
    %1399 = vst [vmem:[#allocation6 + $0x38] sm:$0x3f] %v1371
    %1400 = vst [vmem:[#allocation6 + $0x40] sm:$0xff] %v1372
    %1401 = vst [vmem:[#allocation6 + $0x48] sm:$0x3f] %v1373
    %1402 = vst [vmem:[#allocation6 + $0x50] sm:$0xff] %v1374
    %1403 = vst [vmem:[#allocation6 + $0x58] sm:$0x3f] %v1375
    %1404 = vst [vmem:[#allocation6 + $0x60] sm:$0xff] %v1376
    %1405 = vst [vmem:[#allocation6 + $0x68] sm:$0x3f] %v1377
    %1406 = vst [vmem:[#allocation6 + $0x70] sm:$0xff] %v1378
    %1407 = vst [vmem:[#allocation6 + $0x78] sm:$0x3f] %v1379
    %1408 = vst [vmem:[#allocation6 + $0x80] sm:$0xff] %v1380
    %1409 = vst [vmem:[#allocation6 + $0x88] sm:$0x3f] %v1381
    %1410 = vst [vmem:[#allocation6 + $0x90] sm:$0xff] %v1382
    %1411 = vst [vmem:[#allocation6 + $0x98] sm:$0x3f] %v1383
    %1412 = vst [vmem:[#allocation6 + $0xa0] sm:$0xff] %v1384
    %1413 = vst [vmem:[#allocation6 + $0xa8] sm:$0x3f] %v1385
    %1414 = vst [vmem:[#allocation6 + $0xb0] sm:$0xff] %v1386
    %1415 = vst [vmem:[#allocation6 + $0xb8] sm:$0x3f] %v1387
    %1416 = vst [vmem:[#allocation6 + $0xc0] sm:$0xff] %v1388
    %1417 = vst [vmem:[#allocation6 + $0xc8] sm:$0x3f] %v1389
    %1418 = vst [vmem:[#allocation6 + $0xd0] sm:$0xff] %v1390
    %1419 = vst [vmem:[#allocation6 + $0xd8] sm:$0x3f] %v1391
    %v1420 = vld [vmem:[#allocation2 + $0x1] sm:$0xff]
    %v1421 = vld [vmem:[#allocation2 + $0x9] sm:$0x3f]
    %v1422 = vld [vmem:[#allocation2 + $0x11] sm:$0xff]
    %v1423 = vld [vmem:[#allocation2 + $0x19] sm:$0x3f]
    %v1424 = vld [vmem:[#allocation2 + $0x21] sm:$0xff]
    %v1425 = vld [vmem:[#allocation2 + $0x29] sm:$0x3f]
    %v1426 = vld [vmem:[#allocation2 + $0x31] sm:$0xff]
    %v1427 = vld [vmem:[#allocation2 + $0x39] sm:$0x3f]
    %v1428 = vld [vmem:[#allocation2 + $0x41] sm:$0xff]
    %v1429 = vld [vmem:[#allocation2 + $0x49] sm:$0x3f]
    %v1430 = vld [vmem:[#allocation2 + $0x51] sm:$0xff]
    %v1431 = vld [vmem:[#allocation2 + $0x59] sm:$0x3f]
    %v1432 = vld [vmem:[#allocation2 + $0x61] sm:$0xff]
    %v1433 = vld [vmem:[#allocation2 + $0x69] sm:$0x3f]
    %v1434 = vld [vmem:[#allocation2 + $0x71] sm:$0xff]
    %v1435 = vld [vmem:[#allocation2 + $0x79] sm:$0x3f]
    %v1436 = vld [vmem:[#allocation2 + $0x81] sm:$0xff]
    %v1437 = vld [vmem:[#allocation2 + $0x89] sm:$0x3f]
    %v1438 = vld [vmem:[#allocation2 + $0x91] sm:$0xff]
    %v1439 = vld [vmem:[#allocation2 + $0x99] sm:$0x3f]
    %v1440 = vld [vmem:[#allocation2 + $0xa1] sm:$0xff]
    %v1441 = vld [vmem:[#allocation2 + $0xa9] sm:$0x3f]
    %v1442 = vld [vmem:[#allocation2 + $0xb1] sm:$0xff]
    %v1443 = vld [vmem:[#allocation2 + $0xb9] sm:$0x3f]
    %v1444 = vld [vmem:[#allocation2 + $0xc1] sm:$0xff]
    %v1445 = vld [vmem:[#allocation2 + $0xc9] sm:$0x3f]
    %v1446 = vld [vmem:[#allocation2 + $0xd1] sm:$0xff]
    %v1447 = vld [vmem:[#allocation2 + $0xd9] sm:$0x3f]
    %s1448 = scalar_lea.vmem [#allocation6], 224
    %1449 = vst [vmem:[%s1448] sm:$0xff] %v1420
    %1450 = vst [vmem:[%s1448 + $0x8] sm:$0x3f] %v1421
    %1451 = vst [vmem:[%s1448 + $0x10] sm:$0xff] %v1422
    %1452 = vst [vmem:[%s1448 + $0x18] sm:$0x3f] %v1423
    %1453 = vst [vmem:[%s1448 + $0x20] sm:$0xff] %v1424
    %1454 = vst [vmem:[%s1448 + $0x28] sm:$0x3f] %v1425
    %1455 = vst [vmem:[%s1448 + $0x30] sm:$0xff] %v1426
    %1456 = vst [vmem:[%s1448 + $0x38] sm:$0x3f] %v1427
    %1457 = vst [vmem:[%s1448 + $0x40] sm:$0xff] %v1428
    %1458 = vst [vmem:[%s1448 + $0x48] sm:$0x3f] %v1429
    %1459 = vst [vmem:[%s1448 + $0x50] sm:$0xff] %v1430
    %1460 = vst [vmem:[%s1448 + $0x58] sm:$0x3f] %v1431
    %1461 = vst [vmem:[%s1448 + $0x60] sm:$0xff] %v1432
    %1462 = vst [vmem:[%s1448 + $0x68] sm:$0x3f] %v1433
    %1463 = vst [vmem:[%s1448 + $0x70] sm:$0xff] %v1434
    %1464 = vst [vmem:[%s1448 + $0x78] sm:$0x3f] %v1435
    %1465 = vst [vmem:[%s1448 + $0x80] sm:$0xff] %v1436
    %1466 = vst [vmem:[%s1448 + $0x88] sm:$0x3f] %v1437
    %1467 = vst [vmem:[%s1448 + $0x90] sm:$0xff] %v1438
    %1468 = vst [vmem:[%s1448 + $0x98] sm:$0x3f] %v1439
    %1469 = vst [vmem:[%s1448 + $0xa0] sm:$0xff] %v1440
    %1470 = vst [vmem:[%s1448 + $0xa8] sm:$0x3f] %v1441
    %1471 = vst [vmem:[%s1448 + $0xb0] sm:$0xff] %v1442
    %1472 = vst [vmem:[%s1448 + $0xb8] sm:$0x3f] %v1443
    %1473 = vst [vmem:[%s1448 + $0xc0] sm:$0xff] %v1444
    %1474 = vst [vmem:[%s1448 + $0xc8] sm:$0x3f] %v1445
    %1475 = vst [vmem:[%s1448 + $0xd0] sm:$0xff] %v1446
    %1476 = vst [vmem:[%s1448 + $0xd8] sm:$0x3f] %v1447
    %v1477 = vld [vmem:[#allocation2 + $0x2] sm:$0xff]
    %v1478 = vld [vmem:[#allocation2 + $0xa] sm:$0x3f]
    %v1479 = vld [vmem:[#allocation2 + $0x12] sm:$0xff]
    %v1480 = vld [vmem:[#allocation2 + $0x1a] sm:$0x3f]
    %v1481 = vld [vmem:[#allocation2 + $0x22] sm:$0xff]
    %v1482 = vld [vmem:[#allocation2 + $0x2a] sm:$0x3f]
    %v1483 = vld [vmem:[#allocation2 + $0x32] sm:$0xff]
    %v1484 = vld [vmem:[#allocation2 + $0x3a] sm:$0x3f]
    %v1485 = vld [vmem:[#allocation2 + $0x42] sm:$0xff]
    %v1486 = vld [vmem:[#allocation2 + $0x4a] sm:$0x3f]
    %v1487 = vld [vmem:[#allocation2 + $0x52] sm:$0xff]
    %v1488 = vld [vmem:[#allocation2 + $0x5a] sm:$0x3f]
    %v1489 = vld [vmem:[#allocation2 + $0x62] sm:$0xff]
    %v1490 = vld [vmem:[#allocation2 + $0x6a] sm:$0x3f]
    %v1491 = vld [vmem:[#allocation2 + $0x72] sm:$0xff]
    %v1492 = vld [vmem:[#allocation2 + $0x7a] sm:$0x3f]
    %v1493 = vld [vmem:[#allocation2 + $0x82] sm:$0xff]
    %v1494 = vld [vmem:[#allocation2 + $0x8a] sm:$0x3f]
    %v1495 = vld [vmem:[#allocation2 + $0x92] sm:$0xff]
    %v1496 = vld [vmem:[#allocation2 + $0x9a] sm:$0x3f]
    %v1497 = vld [vmem:[#allocation2 + $0xa2] sm:$0xff]
    %v1498 = vld [vmem:[#allocation2 + $0xaa] sm:$0x3f]
    %v1499 = vld [vmem:[#allocation2 + $0xb2] sm:$0xff]
    %v1500 = vld [vmem:[#allocation2 + $0xba] sm:$0x3f]
    %v1501 = vld [vmem:[#allocation2 + $0xc2] sm:$0xff]
    %v1502 = vld [vmem:[#allocation2 + $0xca] sm:$0x3f]
    %v1503 = vld [vmem:[#allocation2 + $0xd2] sm:$0xff]
    %v1504 = vld [vmem:[#allocation2 + $0xda] sm:$0x3f]
    %s1505 = scalar_lea.vmem [#allocation6], 448
    %1506 = vst [vmem:[%s1505] sm:$0xff] %v1477
    %1507 = vst [vmem:[%s1505 + $0x8] sm:$0x3f] %v1478
    %1508 = vst [vmem:[%s1505 + $0x10] sm:$0xff] %v1479
    %1509 = vst [vmem:[%s1505 + $0x18] sm:$0x3f] %v1480
    %1510 = vst [vmem:[%s1505 + $0x20] sm:$0xff] %v1481
    %1511 = vst [vmem:[%s1505 + $0x28] sm:$0x3f] %v1482
    %1512 = vst [vmem:[%s1505 + $0x30] sm:$0xff] %v1483
    %1513 = vst [vmem:[%s1505 + $0x38] sm:$0x3f] %v1484
    %1514 = vst [vmem:[%s1505 + $0x40] sm:$0xff] %v1485
    %1515 = vst [vmem:[%s1505 + $0x48] sm:$0x3f] %v1486
    %1516 = vst [vmem:[%s1505 + $0x50] sm:$0xff] %v1487
    %1517 = vst [vmem:[%s1505 + $0x58] sm:$0x3f] %v1488
    %1518 = vst [vmem:[%s1505 + $0x60] sm:$0xff] %v1489
    %1519 = vst [vmem:[%s1505 + $0x68] sm:$0x3f] %v1490
    %1520 = vst [vmem:[%s1505 + $0x70] sm:$0xff] %v1491
    %1521 = vst [vmem:[%s1505 + $0x78] sm:$0x3f] %v1492
    %1522 = vst [vmem:[%s1505 + $0x80] sm:$0xff] %v1493
    %1523 = vst [vmem:[%s1505 + $0x88] sm:$0x3f] %v1494
    %1524 = vst [vmem:[%s1505 + $0x90] sm:$0xff] %v1495
    %1525 = vst [vmem:[%s1505 + $0x98] sm:$0x3f] %v1496
    %1526 = vst [vmem:[%s1505 + $0xa0] sm:$0xff] %v1497
    %1527 = vst [vmem:[%s1505 + $0xa8] sm:$0x3f] %v1498
    %1528 = vst [vmem:[%s1505 + $0xb0] sm:$0xff] %v1499
    %1529 = vst [vmem:[%s1505 + $0xb8] sm:$0x3f] %v1500
    %1530 = vst [vmem:[%s1505 + $0xc0] sm:$0xff] %v1501
    %1531 = vst [vmem:[%s1505 + $0xc8] sm:$0x3f] %v1502
    %1532 = vst [vmem:[%s1505 + $0xd0] sm:$0xff] %v1503
    %1533 = vst [vmem:[%s1505 + $0xd8] sm:$0x3f] %v1504
    %v1534 = vld [vmem:[%s396] sm:$0xff]
    %v1535 = vld [vmem:[%s396 + $0x8] sm:$0x3f]
    %v1536 = vld [vmem:[%s396 + $0x10] sm:$0xff]
    %v1537 = vld [vmem:[%s396 + $0x18] sm:$0x3f]
    %v1538 = vld [vmem:[%s396 + $0x20] sm:$0xff]
    %v1539 = vld [vmem:[%s396 + $0x28] sm:$0x3f]
    %v1540 = vld [vmem:[%s396 + $0x30] sm:$0xff]
    %v1541 = vld [vmem:[%s396 + $0x38] sm:$0x3f]
    %v1542 = vld [vmem:[%s396 + $0x40] sm:$0xff]
    %v1543 = vld [vmem:[%s396 + $0x48] sm:$0x3f]
    %v1544 = vld [vmem:[%s396 + $0x50] sm:$0xff]
    %v1545 = vld [vmem:[%s396 + $0x58] sm:$0x3f]
    %v1546 = vld [vmem:[%s396 + $0x60] sm:$0xff]
    %v1547 = vld [vmem:[%s396 + $0x68] sm:$0x3f]
    %v1548 = vld [vmem:[%s396 + $0x70] sm:$0xff]
    %v1549 = vld [vmem:[%s396 + $0x78] sm:$0x3f]
    %v1550 = vld [vmem:[%s396 + $0x80] sm:$0xff]
    %v1551 = vld [vmem:[%s396 + $0x88] sm:$0x3f]
    %v1552 = vld [vmem:[%s396 + $0x90] sm:$0xff]
    %v1553 = vld [vmem:[%s396 + $0x98] sm:$0x3f]
    %v1554 = vld [vmem:[%s396 + $0xa0] sm:$0xff]
    %v1555 = vld [vmem:[%s396 + $0xa8] sm:$0x3f]
    %v1556 = vld [vmem:[%s396 + $0xb0] sm:$0xff]
    %v1557 = vld [vmem:[%s396 + $0xb8] sm:$0x3f]
    %v1558 = vld [vmem:[%s396 + $0xc0] sm:$0xff]
    %v1559 = vld [vmem:[%s396 + $0xc8] sm:$0x3f]
    %v1560 = vld [vmem:[%s396 + $0xd0] sm:$0xff]
    %v1561 = vld [vmem:[%s396 + $0xd8] sm:$0x3f]
    %s1562 = scalar_lea.vmem [#allocation6], 672
    %1563 = vst [vmem:[%s1562] sm:$0xff] %v1534
    %1564 = vst [vmem:[%s1562 + $0x8] sm:$0x3f] %v1535
    %1565 = vst [vmem:[%s1562 + $0x10] sm:$0xff] %v1536
    %1566 = vst [vmem:[%s1562 + $0x18] sm:$0x3f] %v1537
    %1567 = vst [vmem:[%s1562 + $0x20] sm:$0xff] %v1538
    %1568 = vst [vmem:[%s1562 + $0x28] sm:$0x3f] %v1539
    %1569 = vst [vmem:[%s1562 + $0x30] sm:$0xff] %v1540
    %1570 = vst [vmem:[%s1562 + $0x38] sm:$0x3f] %v1541
    %1571 = vst [vmem:[%s1562 + $0x40] sm:$0xff] %v1542
    %1572 = vst [vmem:[%s1562 + $0x48] sm:$0x3f] %v1543
    %1573 = vst [vmem:[%s1562 + $0x50] sm:$0xff] %v1544
    %1574 = vst [vmem:[%s1562 + $0x58] sm:$0x3f] %v1545
    %1575 = vst [vmem:[%s1562 + $0x60] sm:$0xff] %v1546
    %1576 = vst [vmem:[%s1562 + $0x68] sm:$0x3f] %v1547
    %1577 = vst [vmem:[%s1562 + $0x70] sm:$0xff] %v1548
    %1578 = vst [vmem:[%s1562 + $0x78] sm:$0x3f] %v1549
    %1579 = vst [vmem:[%s1562 + $0x80] sm:$0xff] %v1550
    %1580 = vst [vmem:[%s1562 + $0x88] sm:$0x3f] %v1551
    %1581 = vst [vmem:[%s1562 + $0x90] sm:$0xff] %v1552
    %1582 = vst [vmem:[%s1562 + $0x98] sm:$0x3f] %v1553
    %1583 = vst [vmem:[%s1562 + $0xa0] sm:$0xff] %v1554
    %1584 = vst [vmem:[%s1562 + $0xa8] sm:$0x3f] %v1555
    %1585 = vst [vmem:[%s1562 + $0xb0] sm:$0xff] %v1556
    %1586 = vst [vmem:[%s1562 + $0xb8] sm:$0x3f] %v1557
    %1587 = vst [vmem:[%s1562 + $0xc0] sm:$0xff] %v1558
    %1588 = vst [vmem:[%s1562 + $0xc8] sm:$0x3f] %v1559
    %1589 = vst [vmem:[%s1562 + $0xd0] sm:$0xff] %v1560
    %1590 = vst [vmem:[%s1562 + $0xd8] sm:$0x3f] %v1561
    %v1591 = vld [vmem:[%s396 + $0x1] sm:$0xff]
    %v1592 = vld [vmem:[%s396 + $0x9] sm:$0x3f]
    %v1593 = vld [vmem:[%s396 + $0x11] sm:$0xff]
    %v1594 = vld [vmem:[%s396 + $0x19] sm:$0x3f]
    %v1595 = vld [vmem:[%s396 + $0x21] sm:$0xff]
    %v1596 = vld [vmem:[%s396 + $0x29] sm:$0x3f]
    %v1597 = vld [vmem:[%s396 + $0x31] sm:$0xff]
    %v1598 = vld [vmem:[%s396 + $0x39] sm:$0x3f]
    %v1599 = vld [vmem:[%s396 + $0x41] sm:$0xff]
    %v1600 = vld [vmem:[%s396 + $0x49] sm:$0x3f]
    %v1601 = vld [vmem:[%s396 + $0x51] sm:$0xff]
    %v1602 = vld [vmem:[%s396 + $0x59] sm:$0x3f]
    %v1603 = vld [vmem:[%s396 + $0x61] sm:$0xff]
    %v1604 = vld [vmem:[%s396 + $0x69] sm:$0x3f]
    %v1605 = vld [vmem:[%s396 + $0x71] sm:$0xff]
    %v1606 = vld [vmem:[%s396 + $0x79] sm:$0x3f]
    %v1607 = vld [vmem:[%s396 + $0x81] sm:$0xff]
    %v1608 = vld [vmem:[%s396 + $0x89] sm:$0x3f]
    %v1609 = vld [vmem:[%s396 + $0x91] sm:$0xff]
    %v1610 = vld [vmem:[%s396 + $0x99] sm:$0x3f]
    %v1611 = vld [vmem:[%s396 + $0xa1] sm:$0xff]
    %v1612 = vld [vmem:[%s396 + $0xa9] sm:$0x3f]
    %v1613 = vld [vmem:[%s396 + $0xb1] sm:$0xff]
    %v1614 = vld [vmem:[%s396 + $0xb9] sm:$0x3f]
    %v1615 = vld [vmem:[%s396 + $0xc1] sm:$0xff]
    %v1616 = vld [vmem:[%s396 + $0xc9] sm:$0x3f]
    %v1617 = vld [vmem:[%s396 + $0xd1] sm:$0xff]
    %v1618 = vld [vmem:[%s396 + $0xd9] sm:$0x3f]
    %s1619 = scalar_lea.vmem [#allocation6], 896
    %1620 = vst [vmem:[%s1619] sm:$0xff] %v1591
    %1621 = vst [vmem:[%s1619 + $0x8] sm:$0x3f] %v1592
    %1622 = vst [vmem:[%s1619 + $0x10] sm:$0xff] %v1593
    %1623 = vst [vmem:[%s1619 + $0x18] sm:$0x3f] %v1594
    %1624 = vst [vmem:[%s1619 + $0x20] sm:$0xff] %v1595
    %1625 = vst [vmem:[%s1619 + $0x28] sm:$0x3f] %v1596
    %1626 = vst [vmem:[%s1619 + $0x30] sm:$0xff] %v1597
    %1627 = vst [vmem:[%s1619 + $0x38] sm:$0x3f] %v1598
    %1628 = vst [vmem:[%s1619 + $0x40] sm:$0xff] %v1599
    %1629 = vst [vmem:[%s1619 + $0x48] sm:$0x3f] %v1600
    %1630 = vst [vmem:[%s1619 + $0x50] sm:$0xff] %v1601
    %1631 = vst [vmem:[%s1619 + $0x58] sm:$0x3f] %v1602
    %1632 = vst [vmem:[%s1619 + $0x60] sm:$0xff] %v1603
    %1633 = vst [vmem:[%s1619 + $0x68] sm:$0x3f] %v1604
    %1634 = vst [vmem:[%s1619 + $0x70] sm:$0xff] %v1605
    %1635 = vst [vmem:[%s1619 + $0x78] sm:$0x3f] %v1606
    %1636 = vst [vmem:[%s1619 + $0x80] sm:$0xff] %v1607
    %1637 = vst [vmem:[%s1619 + $0x88] sm:$0x3f] %v1608
    %1638 = vst [vmem:[%s1619 + $0x90] sm:$0xff] %v1609
    %1639 = vst [vmem:[%s1619 + $0x98] sm:$0x3f] %v1610
    %1640 = vst [vmem:[%s1619 + $0xa0] sm:$0xff] %v1611
    %1641 = vst [vmem:[%s1619 + $0xa8] sm:$0x3f] %v1612
    %1642 = vst [vmem:[%s1619 + $0xb0] sm:$0xff] %v1613
    %1643 = vst [vmem:[%s1619 + $0xb8] sm:$0x3f] %v1614
    %1644 = vst [vmem:[%s1619 + $0xc0] sm:$0xff] %v1615
    %1645 = vst [vmem:[%s1619 + $0xc8] sm:$0x3f] %v1616
    %1646 = vst [vmem:[%s1619 + $0xd0] sm:$0xff] %v1617
    %1647 = vst [vmem:[%s1619 + $0xd8] sm:$0x3f] %v1618
    %v1648 = vld [vmem:[%s396 + $0x2] sm:$0xff]
    %v1649 = vld [vmem:[%s396 + $0xa] sm:$0x3f]
    %v1650 = vld [vmem:[%s396 + $0x12] sm:$0xff]
    %v1651 = vld [vmem:[%s396 + $0x1a] sm:$0x3f]
    %v1652 = vld [vmem:[%s396 + $0x22] sm:$0xff]
    %v1653 = vld [vmem:[%s396 + $0x2a] sm:$0x3f]
    %v1654 = vld [vmem:[%s396 + $0x32] sm:$0xff]
    %v1655 = vld [vmem:[%s396 + $0x3a] sm:$0x3f]
    %v1656 = vld [vmem:[%s396 + $0x42] sm:$0xff]
    %v1657 = vld [vmem:[%s396 + $0x4a] sm:$0x3f]
    %v1658 = vld [vmem:[%s396 + $0x52] sm:$0xff]
    %v1659 = vld [vmem:[%s396 + $0x5a] sm:$0x3f]
    %v1660 = vld [vmem:[%s396 + $0x62] sm:$0xff]
    %v1661 = vld [vmem:[%s396 + $0x6a] sm:$0x3f]
    %v1662 = vld [vmem:[%s396 + $0x72] sm:$0xff]
    %v1663 = vld [vmem:[%s396 + $0x7a] sm:$0x3f]
    %v1664 = vld [vmem:[%s396 + $0x82] sm:$0xff]
    %v1665 = vld [vmem:[%s396 + $0x8a] sm:$0x3f]
    %v1666 = vld [vmem:[%s396 + $0x92] sm:$0xff]
    %v1667 = vld [vmem:[%s396 + $0x9a] sm:$0x3f]
    %v1668 = vld [vmem:[%s396 + $0xa2] sm:$0xff]
    %v1669 = vld [vmem:[%s396 + $0xaa] sm:$0x3f]
    %v1670 = vld [vmem:[%s396 + $0xb2] sm:$0xff]
    %v1671 = vld [vmem:[%s396 + $0xba] sm:$0x3f]
    %v1672 = vld [vmem:[%s396 + $0xc2] sm:$0xff]
    %v1673 = vld [vmem:[%s396 + $0xca] sm:$0x3f]
    %v1674 = vld [vmem:[%s396 + $0xd2] sm:$0xff]
    %v1675 = vld [vmem:[%s396 + $0xda] sm:$0x3f]
    %s1676 = scalar_lea.vmem [#allocation6], 1120
    %1677 = vst [vmem:[%s1676] sm:$0xff] %v1648
    %1678 = vst [vmem:[%s1676 + $0x8] sm:$0x3f] %v1649
    %1679 = vst [vmem:[%s1676 + $0x10] sm:$0xff] %v1650
    %1680 = vst [vmem:[%s1676 + $0x18] sm:$0x3f] %v1651
    %1681 = vst [vmem:[%s1676 + $0x20] sm:$0xff] %v1652
    %1682 = vst [vmem:[%s1676 + $0x28] sm:$0x3f] %v1653
    %1683 = vst [vmem:[%s1676 + $0x30] sm:$0xff] %v1654
    %1684 = vst [vmem:[%s1676 + $0x38] sm:$0x3f] %v1655
    %1685 = vst [vmem:[%s1676 + $0x40] sm:$0xff] %v1656
    %1686 = vst [vmem:[%s1676 + $0x48] sm:$0x3f] %v1657
    %1687 = vst [vmem:[%s1676 + $0x50] sm:$0xff] %v1658
    %1688 = vst [vmem:[%s1676 + $0x58] sm:$0x3f] %v1659
    %1689 = vst [vmem:[%s1676 + $0x60] sm:$0xff] %v1660
    %1690 = vst [vmem:[%s1676 + $0x68] sm:$0x3f] %v1661
    %1691 = vst [vmem:[%s1676 + $0x70] sm:$0xff] %v1662
    %1692 = vst [vmem:[%s1676 + $0x78] sm:$0x3f] %v1663
    %1693 = vst [vmem:[%s1676 + $0x80] sm:$0xff] %v1664
    %1694 = vst [vmem:[%s1676 + $0x88] sm:$0x3f] %v1665
    %1695 = vst [vmem:[%s1676 + $0x90] sm:$0xff] %v1666
    %1696 = vst [vmem:[%s1676 + $0x98] sm:$0x3f] %v1667
    %1697 = vst [vmem:[%s1676 + $0xa0] sm:$0xff] %v1668
    %1698 = vst [vmem:[%s1676 + $0xa8] sm:$0x3f] %v1669
    %1699 = vst [vmem:[%s1676 + $0xb0] sm:$0xff] %v1670
    %1700 = vst [vmem:[%s1676 + $0xb8] sm:$0x3f] %v1671
    %1701 = vst [vmem:[%s1676 + $0xc0] sm:$0xff] %v1672
    %1702 = vst [vmem:[%s1676 + $0xc8] sm:$0x3f] %v1673
    %1703 = vst [vmem:[%s1676 + $0xd0] sm:$0xff] %v1674
    %1704 = vst [vmem:[%s1676 + $0xd8] sm:$0x3f] %v1675
    %v1705 = vld [vmem:[%s736] sm:$0xff]
    %v1706 = vld [vmem:[%s736 + $0x8] sm:$0x3f]
    %v1707 = vld [vmem:[%s736 + $0x10] sm:$0xff]
    %v1708 = vld [vmem:[%s736 + $0x18] sm:$0x3f]
    %v1709 = vld [vmem:[%s736 + $0x20] sm:$0xff]
    %v1710 = vld [vmem:[%s736 + $0x28] sm:$0x3f]
    %v1711 = vld [vmem:[%s736 + $0x30] sm:$0xff]
    %v1712 = vld [vmem:[%s736 + $0x38] sm:$0x3f]
    %v1713 = vld [vmem:[%s736 + $0x40] sm:$0xff]
    %v1714 = vld [vmem:[%s736 + $0x48] sm:$0x3f]
    %v1715 = vld [vmem:[%s736 + $0x50] sm:$0xff]
    %v1716 = vld [vmem:[%s736 + $0x58] sm:$0x3f]
    %v1717 = vld [vmem:[%s736 + $0x60] sm:$0xff]
    %v1718 = vld [vmem:[%s736 + $0x68] sm:$0x3f]
    %v1719 = vld [vmem:[%s736 + $0x70] sm:$0xff]
    %v1720 = vld [vmem:[%s736 + $0x78] sm:$0x3f]
    %v1721 = vld [vmem:[%s736 + $0x80] sm:$0xff]
    %v1722 = vld [vmem:[%s736 + $0x88] sm:$0x3f]
    %v1723 = vld [vmem:[%s736 + $0x90] sm:$0xff]
    %v1724 = vld [vmem:[%s736 + $0x98] sm:$0x3f]
    %v1725 = vld [vmem:[%s736 + $0xa0] sm:$0xff]
    %v1726 = vld [vmem:[%s736 + $0xa8] sm:$0x3f]
    %v1727 = vld [vmem:[%s736 + $0xb0] sm:$0xff]
    %v1728 = vld [vmem:[%s736 + $0xb8] sm:$0x3f]
    %v1729 = vld [vmem:[%s736 + $0xc0] sm:$0xff]
    %v1730 = vld [vmem:[%s736 + $0xc8] sm:$0x3f]
    %v1731 = vld [vmem:[%s736 + $0xd0] sm:$0xff]
    %v1732 = vld [vmem:[%s736 + $0xd8] sm:$0x3f]
    %s1733 = scalar_lea.vmem [#allocation6], 1344
    %1734 = vst [vmem:[%s1733] sm:$0xff] %v1705
    %1735 = vst [vmem:[%s1733 + $0x8] sm:$0x3f] %v1706
    %1736 = vst [vmem:[%s1733 + $0x10] sm:$0xff] %v1707
    %1737 = vst [vmem:[%s1733 + $0x18] sm:$0x3f] %v1708
    %1738 = vst [vmem:[%s1733 + $0x20] sm:$0xff] %v1709
    %1739 = vst [vmem:[%s1733 + $0x28] sm:$0x3f] %v1710
    %1740 = vst [vmem:[%s1733 + $0x30] sm:$0xff] %v1711
    %1741 = vst [vmem:[%s1733 + $0x38] sm:$0x3f] %v1712
    %1742 = vst [vmem:[%s1733 + $0x40] sm:$0xff] %v1713
    %1743 = vst [vmem:[%s1733 + $0x48] sm:$0x3f] %v1714
    %1744 = vst [vmem:[%s1733 + $0x50] sm:$0xff] %v1715
    %1745 = vst [vmem:[%s1733 + $0x58] sm:$0x3f] %v1716
    %1746 = vst [vmem:[%s1733 + $0x60] sm:$0xff] %v1717
    %1747 = vst [vmem:[%s1733 + $0x68] sm:$0x3f] %v1718
    %1748 = vst [vmem:[%s1733 + $0x70] sm:$0xff] %v1719
    %1749 = vst [vmem:[%s1733 + $0x78] sm:$0x3f] %v1720
    %1750 = vst [vmem:[%s1733 + $0x80] sm:$0xff] %v1721
    %1751 = vst [vmem:[%s1733 + $0x88] sm:$0x3f] %v1722
    %1752 = vst [vmem:[%s1733 + $0x90] sm:$0xff] %v1723
    %1753 = vst [vmem:[%s1733 + $0x98] sm:$0x3f] %v1724
    %1754 = vst [vmem:[%s1733 + $0xa0] sm:$0xff] %v1725
    %1755 = vst [vmem:[%s1733 + $0xa8] sm:$0x3f] %v1726
    %1756 = vst [vmem:[%s1733 + $0xb0] sm:$0xff] %v1727
    %1757 = vst [vmem:[%s1733 + $0xb8] sm:$0x3f] %v1728
    %1758 = vst [vmem:[%s1733 + $0xc0] sm:$0xff] %v1729
    %1759 = vst [vmem:[%s1733 + $0xc8] sm:$0x3f] %v1730
    %1760 = vst [vmem:[%s1733 + $0xd0] sm:$0xff] %v1731
    %1761 = vst [vmem:[%s1733 + $0xd8] sm:$0x3f] %v1732
    %v1762 = vld [vmem:[%s736 + $0x1] sm:$0xff]
    %v1763 = vld [vmem:[%s736 + $0x9] sm:$0x3f]
    %v1764 = vld [vmem:[%s736 + $0x11] sm:$0xff]
    %v1765 = vld [vmem:[%s736 + $0x19] sm:$0x3f]
    %v1766 = vld [vmem:[%s736 + $0x21] sm:$0xff]
    %v1767 = vld [vmem:[%s736 + $0x29] sm:$0x3f]
    %v1768 = vld [vmem:[%s736 + $0x31] sm:$0xff]
    %v1769 = vld [vmem:[%s736 + $0x39] sm:$0x3f]
    %v1770 = vld [vmem:[%s736 + $0x41] sm:$0xff]
    %v1771 = vld [vmem:[%s736 + $0x49] sm:$0x3f]
    %v1772 = vld [vmem:[%s736 + $0x51] sm:$0xff]
    %v1773 = vld [vmem:[%s736 + $0x59] sm:$0x3f]
    %v1774 = vld [vmem:[%s736 + $0x61] sm:$0xff]
    %v1775 = vld [vmem:[%s736 + $0x69] sm:$0x3f]
    %v1776 = vld [vmem:[%s736 + $0x71] sm:$0xff]
    %v1777 = vld [vmem:[%s736 + $0x79] sm:$0x3f]
    %v1778 = vld [vmem:[%s736 + $0x81] sm:$0xff]
    %v1779 = vld [vmem:[%s736 + $0x89] sm:$0x3f]
    %v1780 = vld [vmem:[%s736 + $0x91] sm:$0xff]
    %v1781 = vld [vmem:[%s736 + $0x99] sm:$0x3f]
    %v1782 = vld [vmem:[%s736 + $0xa1] sm:$0xff]
    %v1783 = vld [vmem:[%s736 + $0xa9] sm:$0x3f]
    %v1784 = vld [vmem:[%s736 + $0xb1] sm:$0xff]
    %v1785 = vld [vmem:[%s736 + $0xb9] sm:$0x3f]
    %v1786 = vld [vmem:[%s736 + $0xc1] sm:$0xff]
    %v1787 = vld [vmem:[%s736 + $0xc9] sm:$0x3f]
    %v1788 = vld [vmem:[%s736 + $0xd1] sm:$0xff]
    %v1789 = vld [vmem:[%s736 + $0xd9] sm:$0x3f]
    %s1790 = scalar_lea.vmem [#allocation6], 1568
    %1791 = vst [vmem:[%s1790] sm:$0xff] %v1762
    %1792 = vst [vmem:[%s1790 + $0x8] sm:$0x3f] %v1763
    %1793 = vst [vmem:[%s1790 + $0x10] sm:$0xff] %v1764
    %1794 = vst [vmem:[%s1790 + $0x18] sm:$0x3f] %v1765
    %1795 = vst [vmem:[%s1790 + $0x20] sm:$0xff] %v1766
    %1796 = vst [vmem:[%s1790 + $0x28] sm:$0x3f] %v1767
    %1797 = vst [vmem:[%s1790 + $0x30] sm:$0xff] %v1768
    %1798 = vst [vmem:[%s1790 + $0x38] sm:$0x3f] %v1769
    %1799 = vst [vmem:[%s1790 + $0x40] sm:$0xff] %v1770
    %1800 = vst [vmem:[%s1790 + $0x48] sm:$0x3f] %v1771
    %1801 = vst [vmem:[%s1790 + $0x50] sm:$0xff] %v1772
    %1802 = vst [vmem:[%s1790 + $0x58] sm:$0x3f] %v1773
    %1803 = vst [vmem:[%s1790 + $0x60] sm:$0xff] %v1774
    %1804 = vst [vmem:[%s1790 + $0x68] sm:$0x3f] %v1775
    %1805 = vst [vmem:[%s1790 + $0x70] sm:$0xff] %v1776
    %1806 = vst [vmem:[%s1790 + $0x78] sm:$0x3f] %v1777
    %1807 = vst [vmem:[%s1790 + $0x80] sm:$0xff] %v1778
    %1808 = vst [vmem:[%s1790 + $0x88] sm:$0x3f] %v1779
    %1809 = vst [vmem:[%s1790 + $0x90] sm:$0xff] %v1780
    %1810 = vst [vmem:[%s1790 + $0x98] sm:$0x3f] %v1781
    %1811 = vst [vmem:[%s1790 + $0xa0] sm:$0xff] %v1782
    %1812 = vst [vmem:[%s1790 + $0xa8] sm:$0x3f] %v1783
    %1813 = vst [vmem:[%s1790 + $0xb0] sm:$0xff] %v1784
    %1814 = vst [vmem:[%s1790 + $0xb8] sm:$0x3f] %v1785
    %1815 = vst [vmem:[%s1790 + $0xc0] sm:$0xff] %v1786
    %1816 = vst [vmem:[%s1790 + $0xc8] sm:$0x3f] %v1787
    %1817 = vst [vmem:[%s1790 + $0xd0] sm:$0xff] %v1788
    %1818 = vst [vmem:[%s1790 + $0xd8] sm:$0x3f] %v1789
    %v1819 = vld [vmem:[%s736 + $0x2] sm:$0xff]
    %v1820 = vld [vmem:[%s736 + $0xa] sm:$0x3f]
    %v1821 = vld [vmem:[%s736 + $0x12] sm:$0xff]
    %v1822 = vld [vmem:[%s736 + $0x1a] sm:$0x3f]
    %v1823 = vld [vmem:[%s736 + $0x22] sm:$0xff]
    %v1824 = vld [vmem:[%s736 + $0x2a] sm:$0x3f]
    %v1825 = vld [vmem:[%s736 + $0x32] sm:$0xff]
    %v1826 = vld [vmem:[%s736 + $0x3a] sm:$0x3f]
    %v1827 = vld [vmem:[%s736 + $0x42] sm:$0xff]
    %v1828 = vld [vmem:[%s736 + $0x4a] sm:$0x3f]
    %v1829 = vld [vmem:[%s736 + $0x52] sm:$0xff]
    %v1830 = vld [vmem:[%s736 + $0x5a] sm:$0x3f]
    %v1831 = vld [vmem:[%s736 + $0x62] sm:$0xff]
    %v1832 = vld [vmem:[%s736 + $0x6a] sm:$0x3f]
    %v1833 = vld [vmem:[%s736 + $0x72] sm:$0xff]
    %v1834 = vld [vmem:[%s736 + $0x7a] sm:$0x3f]
    %v1835 = vld [vmem:[%s736 + $0x82] sm:$0xff]
    %v1836 = vld [vmem:[%s736 + $0x8a] sm:$0x3f]
    %v1837 = vld [vmem:[%s736 + $0x92] sm:$0xff]
    %v1838 = vld [vmem:[%s736 + $0x9a] sm:$0x3f]
    %v1839 = vld [vmem:[%s736 + $0xa2] sm:$0xff]
    %v1840 = vld [vmem:[%s736 + $0xaa] sm:$0x3f]
    %v1841 = vld [vmem:[%s736 + $0xb2] sm:$0xff]
    %v1842 = vld [vmem:[%s736 + $0xba] sm:$0x3f]
    %v1843 = vld [vmem:[%s736 + $0xc2] sm:$0xff]
    %v1844 = vld [vmem:[%s736 + $0xca] sm:$0x3f]
    %v1845 = vld [vmem:[%s736 + $0xd2] sm:$0xff]
    %v1846 = vld [vmem:[%s736 + $0xda] sm:$0x3f]
    %s1847 = scalar_lea.vmem [#allocation6], 1792
    %1848 = vst [vmem:[%s1847] sm:$0xff] %v1819
    %1849 = vst [vmem:[%s1847 + $0x8] sm:$0x3f] %v1820
    %1850 = vst [vmem:[%s1847 + $0x10] sm:$0xff] %v1821
    %1851 = vst [vmem:[%s1847 + $0x18] sm:$0x3f] %v1822
    %1852 = vst [vmem:[%s1847 + $0x20] sm:$0xff] %v1823
    %1853 = vst [vmem:[%s1847 + $0x28] sm:$0x3f] %v1824
    %1854 = vst [vmem:[%s1847 + $0x30] sm:$0xff] %v1825
    %1855 = vst [vmem:[%s1847 + $0x38] sm:$0x3f] %v1826
    %1856 = vst [vmem:[%s1847 + $0x40] sm:$0xff] %v1827
    %1857 = vst [vmem:[%s1847 + $0x48] sm:$0x3f] %v1828
    %1858 = vst [vmem:[%s1847 + $0x50] sm:$0xff] %v1829
    %1859 = vst [vmem:[%s1847 + $0x58] sm:$0x3f] %v1830
    %1860 = vst [vmem:[%s1847 + $0x60] sm:$0xff] %v1831
    %1861 = vst [vmem:[%s1847 + $0x68] sm:$0x3f] %v1832
    %1862 = vst [vmem:[%s1847 + $0x70] sm:$0xff] %v1833
    %1863 = vst [vmem:[%s1847 + $0x78] sm:$0x3f] %v1834
    %1864 = vst [vmem:[%s1847 + $0x80] sm:$0xff] %v1835
    %1865 = vst [vmem:[%s1847 + $0x88] sm:$0x3f] %v1836
    %1866 = vst [vmem:[%s1847 + $0x90] sm:$0xff] %v1837
    %1867 = vst [vmem:[%s1847 + $0x98] sm:$0x3f] %v1838
    %1868 = vst [vmem:[%s1847 + $0xa0] sm:$0xff] %v1839
    %1869 = vst [vmem:[%s1847 + $0xa8] sm:$0x3f] %v1840
    %1870 = vst [vmem:[%s1847 + $0xb0] sm:$0xff] %v1841
    %1871 = vst [vmem:[%s1847 + $0xb8] sm:$0x3f] %v1842
    %1872 = vst [vmem:[%s1847 + $0xc0] sm:$0xff] %v1843
    %1873 = vst [vmem:[%s1847 + $0xc8] sm:$0x3f] %v1844
    %1874 = vst [vmem:[%s1847 + $0xd0] sm:$0xff] %v1845
    %1875 = vst [vmem:[%s1847 + $0xd8] sm:$0x3f] %v1846
    // Predicated region
    $region14: #{tpu_custom_call.1} parent=1 // pred_check
      _
    $region15: #{tpu_custom_call.1} parent=1 // pred_check_branch
      %1877 = sbr.rel (0) target = $region17
    $region16: #{tpu_custom_call.1} parent=1 // pred_region
      %s1879 = ssub.s32 32256, 32256
      %1880 = vsyncadd [#allocation5], %s1879
      %s1881 = sshll.u32 [#allocation6], 4
      %s1882 = int_to_ptr.vmem [resolvable:$true] %s1881
      %1887 = dma.vmem_to_hbm [thread:$0]  %s1882, 32256, %s2, [#allocation5], 128, 128, 8
    $region17: #{tpu_custom_call.1} parent=1 // pred_fallthru
      _
    // Predicated region
    $region18: #{tpu_custom_call.1} parent=1 // pred_check
      _
    $region19: #{tpu_custom_call.1} parent=1 // pred_check_branch
      %1889 = sbr.rel (0) target = $region21
    $region20: #{tpu_custom_call.1} parent=1 // pred_region
      %1890 = dma.done [#allocation5], 32256
    $region21: #{tpu_custom_call.1} parent=1 // pred_fallthru
      _
    %1891 = vsyncpa [#allocation4], 1
    %1892 = vsyncpa [#allocation5], 1

</llo_original>
